<compile_context>
chip_gen: v5e
topology: v5e:2x2
jax: 0.10.0
libtpu: 0.0.40
codegen_flags: <defaults>
</compile_context>

<pallas_src>
import math

import jax
import jax.numpy as jnp
from jax.experimental import pallas as pl
from jax.experimental.pallas import tpu as pltpu  # noqa: F401  (TPU backend assumed)

# ----- problem sizes (small, consistent with the module's forward) -----------
B_BATCH = 2      # batch size
N_SET = 8        # num_electrodes N
D_MODEL = 32     # feature dim d
H_HEADS = 4      # attention heads h
M_INDUCE = 4     # inducing points m
FFN_EXP = 4      # ffn_expansion
LN_EPS = 1e-5    # nn.LayerNorm default eps

SLAB_LANES = 128
NEG_INF = -1e30


# ----- slab layout (row offsets of every packed piece, 8-row aligned) --------
def _slab_layout(d=D_MODEL, h=H_HEADS, m=M_INDUCE, B=B_BATCH, N=N_SET, exp=FFN_EXP):
    layout = {}
    row = 0

    def add(name, nrows, ncols, align=8):
        nonlocal row
        row = ((row + align - 1) // align) * align
        layout[name] = (row, nrows, ncols)
        row += nrows

    add("wx", d, 3 * d)            # [Wk1^T | Wv1^T | Wq2^T * scale]
    add("wq1", d, d)               # Wq1^T * scale
    add("wo1", d, d)
    add("wh", d, 2 * d)            # [Wk2^T | Wv2^T]
    add("wo2", d, d)
    add("w1", d, exp * d)          # FFN Linear(d, 4d) weight^T
    add("w2", exp * d, d)          # FFN Linear(4d, d) weight^T
    add("itile", h * B * m, d)     # inducing points tiled to the blocked-Q row order
    add("hm1", h * B * m, d)       # per-row head lane mask for mha1's blocked Q
    add("hm2", h * B * N, d)       # per-row head lane mask for mha2's blocked Q
    add("bm1", h * B * m, B * N)   # additive batch mask for mha1 scores
    add("bm2", h * B * N, B * m)   # additive batch mask for mha2 scores
    for name, ncols in (("bx", 3 * d), ("bq1", d), ("bo1", d), ("bh", 2 * d),
                        ("bo2", d), ("b1", exp * d), ("b2", d),
                        ("g1", d), ("be1", d), ("g2", d), ("be2", d),
                        ("g3", d), ("be3", d)):
        add(name, 1, ncols, align=1)
    total_rows = ((row + 7) // 8) * 8
    return layout, total_rows


_LAYOUT, _SLAB_ROWS = _slab_layout()


# ----- math helpers (usable both inside the Pallas kernel and in the ref) ----
def _layernorm(x, gamma, beta):
    mu = jnp.mean(x, axis=-1, keepdims=True)
    xc = x - mu
    var = jnp.mean(xc * xc, axis=-1, keepdims=True)
    return xc * jax.lax.rsqrt(var + LN_EPS) * gamma + beta


def _gelu_exact(x):
    # PyTorch nn.GELU() default is the exact erf-based GELU.
    return 0.5 * x * (1.0 + jax.lax.erf(x * (1.0 / math.sqrt(2.0))))


def _softmax_rows(s):
    s = s - jnp.max(s, axis=-1, keepdims=True)
    e = jnp.exp(s)
    return e / jnp.sum(e, axis=-1, keepdims=True)   # exact divide (review note)


# ----- Pallas kernel: whole batch, both MHAs, FFN and 3 LayerNorms ------------
def isab_kernel(x_ref, p_ref, o_ref):
    d, h, m, B, N = D_MODEL, H_HEADS, M_INDUCE, B_BATCH, N_SET

    def pget(name):
        r, nr, nc = _LAYOUT[name]
        return p_ref[r:r + nr, 0:nc]        # static slice of the param slab

    xf = x_ref[...]                                               # (B*N, d)

    # ---- fused x projections: [K1 | V1 | Q2*scale] in one matmul -------------
    xp = jnp.dot(xf, pget("wx"), preferred_element_type=jnp.float32) + pget("bx")
    k1 = xp[:, 0:d]
    v1 = xp[:, d:2 * d]
    q2 = xp[:, 2 * d:3 * d]

    # ---- mha1(I, x, x): all heads & batches in one score + one AV matmul -----
    hm1 = pget("hm1")                                             # (h*B*m, d)
    itile = pget("itile")                                         # (h*B*m, d)
    qb1 = (jnp.dot(itile, pget("wq1"), preferred_element_type=jnp.float32)
           + pget("bq1")) * hm1                                   # head-blocked Q
    s1 = jnp.einsum('qd,kd->qk', qb1, k1,
                    preferred_element_type=jnp.float32) + pget("bm1")
    a1 = _softmax_rows(s1)                                        # (h*B*m, B*N)
    c1 = jnp.dot(a1, v1, preferred_element_type=jnp.float32)      # (h*B*m, d)

    gq = B * m                                                    # rows per head block
    ctx1 = sum(c1[i * gq:(i + 1) * gq] * hm1[i * gq:i * gq + 1] for i in range(h))

    hmat = _layernorm(jnp.dot(ctx1, pget("wo1"), preferred_element_type=jnp.float32)
                      + pget("bo1") + itile[0:gq],
                      pget("g1"), pget("be1"))                    # (B*m, d)

    # ---- fused H projections: [K2 | V2] in one matmul ------------------------
    hp = jnp.dot(hmat, pget("wh"), preferred_element_type=jnp.float32) + pget("bh")
    k2 = hp[:, 0:d]
    v2 = hp[:, d:2 * d]

    # ---- mha2(x, H, H): all heads & batches in one score + one AV matmul -----
    hm2 = pget("hm2")                                             # (h*B*N, d)
    qb2 = jnp.concatenate([q2] * h, axis=0) * hm2                 # head-blocked Q
    s2 = jnp.einsum('qd,kd->qk', qb2, k2,
                    preferred_element_type=jnp.float32) + pget("bm2")
    a2 = _softmax_rows(s2)                                        # (h*B*N, B*m)
    c2 = jnp.dot(a2, v2, preferred_element_type=jnp.float32)      # (h*B*N, d)

    gk = B * N
    ctx2 = sum(c2[i * gk:(i + 1) * gk] * hm2[i * gk:i * gk + 1] for i in range(h))

    z = _layernorm(jnp.dot(ctx2, pget("wo2"), preferred_element_type=jnp.float32)
                   + pget("bo2") + xf, pget("g2"), pget("be2"))   # (B*N, d)

    # ---- FFN + LN3 ------------------------------------------------------------
    f = _gelu_exact(jnp.dot(z, pget("w1"), preferred_element_type=jnp.float32)
                    + pget("b1"))                                 # (B*N, 4d)
    f = jnp.dot(f, pget("w2"), preferred_element_type=jnp.float32) + pget("b2")
    o_ref[...] = _layernorm(z + f, pget("g3"), pget("be3")).astype(o_ref.dtype)


def induced_set_attention_block(x, slab):
    B, N, d = x.shape
    y = pl.pallas_call(
        isab_kernel,
        out_shape=jax.ShapeDtypeStruct((B * N, d), x.dtype),
    )(x.reshape(B * N, d), slab)       # 2 input DMAs, 1 output DMA, no grid
    return y.reshape(B, N, d)


# ----- deterministic parameter construction & host-side packing ---------------
def make_params(key, d=D_MODEL, m=M_INDUCE, exp=FFN_EXP):
    ks = iter(jax.random.split(key, 40))

    def nrm(shape, scale):
        return (scale * jax.random.normal(next(ks), shape)).astype(jnp.float32)

    p = {}
    p["I"] = nrm((m, d), 1.0)                              # nn.Parameter randn(m, d)
    for tag in ("1", "2"):                                 # two MultiheadAttention blocks
        for w in ("wq", "wk", "wv", "wo"):
            p[w + tag] = nrm((d, d), 1.0 / math.sqrt(d))
        for b in ("bq", "bk", "bv", "bo"):
            p[b + tag] = nrm((1, d), 0.02)
    p["w1"] = nrm((exp * d, d), 1.0 / math.sqrt(d))        # Linear(d, 4d)
    p["b1"] = nrm((1, exp * d), 0.02)
    p["w2"] = nrm((d, exp * d), 1.0 / math.sqrt(exp * d))  # Linear(4d, d)
    p["b2"] = nrm((1, d), 0.02)
    for i in ("1", "2", "3"):                              # LayerNorm affine params
        p["g" + i] = jnp.ones((1, d), jnp.float32)
        p["be" + i] = jnp.zeros((1, d), jnp.float32)
    return p


def pack_params(p, d=D_MODEL, h=H_HEADS, m=M_INDUCE, B=B_BATCH, N=N_SET, exp=FFN_EXP):
    """One-time host-side packing of every parameter (plus the constant head /
    batch masks used by the blocked-Q attention) into a single (rows, 128) slab."""
    hd = d // h
    scale = 1.0 / math.sqrt(hd)

    pieces = {
        "wx": jnp.concatenate([p["wk1"].T, p["wv1"].T, p["wq2"].T * scale], axis=1),
        "bx": jnp.concatenate([p["bk1"], p["bv1"], p["bq2"] * scale], axis=1),
        "wq1": p["wq1"].T * scale, "bq1": p["bq1"] * scale,
        "wo1": p["wo1"].T, "bo1": p["bo1"],
        "wh": jnp.concatenate([p["wk2"].T, p["wv2"].T], axis=1),
        "bh": jnp.concatenate([p["bk2"], p["bv2"]], axis=1),
        "wo2": p["wo2"].T, "bo2": p["bo2"],
        "w1": p["w1"].T, "b1": p["b1"],
        "w2": p["w2"].T, "b2": p["b2"],
        "g1": p["g1"], "be1": p["be1"],
        "g2": p["g2"], "be2": p["be2"],
        "g3": p["g3"], "be3": p["be3"],
        # inducing points replicated into the head-blocked row order (head, batch, query)
        "itile": jnp.tile(p["I"], (h * B, 1)),
    }

    lane_head = jnp.arange(d) // hd
    pieces["hm1"] = (lane_head[None, :] ==
                     (jnp.arange(h * B * m) // (B * m))[:, None]).astype(jnp.float32)
    pieces["hm2"] = (lane_head[None, :] ==
                     (jnp.arange(h * B * N) // (B * N))[:, None]).astype(jnp.float32)

    q1_batch = (jnp.arange(h * B * m) % (B * m)) // m
    k1_batch = jnp.arange(B * N) // N
    pieces["bm1"] = jnp.where(q1_batch[:, None] == k1_batch[None, :],
                              0.0, NEG_INF).astype(jnp.float32)
    q2_batch = (jnp.arange(h * B * N) % (B * N)) // N
    k2_batch = jnp.arange(B * m) // m
    pieces["bm2"] = jnp.where(q2_batch[:, None] == k2_batch[None, :],
                              0.0, NEG_INF).astype(jnp.float32)

    slab = jnp.zeros((_SLAB_ROWS, SLAB_LANES), jnp.float32)
    for name, (row, nrows, ncols) in _LAYOUT.items():
        piece = pieces[name]
        assert piece.shape == (nrows, ncols), (name, piece.shape, (nrows, ncols))
        slab = slab.at[row:row + nrows, 0:ncols].set(piece)
    return slab


# ----- pure-JAX reference (same math, vmapped over batch) ---------------------
def _mha_ref(q_in, kv_in, wq, wk, wv, bq, bk, bv, wo, bo, num_heads):
    """PyTorch nn.MultiheadAttention semantics (single sequence, dropout=0)."""
    d = q_in.shape[-1]
    hd = d // num_heads
    scale = 1.0 / math.sqrt(hd)
    q = jnp.dot(q_in, wq.T) + bq
    k = jnp.dot(kv_in, wk.T) + bk
    v = jnp.dot(kv_in, wv.T) + bv
    acc = jnp.zeros((q_in.shape[0], d), jnp.float32)
    for i in range(num_heads):
        sl = slice(i * hd, (i + 1) * hd)
        s = jnp.dot(q[:, sl], k[:, sl].T) * scale
        s = s - jnp.max(s, axis=-1, keepdims=True)
        a = jnp.exp(s)
        a = a / jnp.sum(a, axis=-1, keepdims=True)
        acc = acc + jnp.dot(jnp.dot(a, v[:, sl]), wo[:, sl].T)
    return acc + bo


def reference_forward(x, p):
    def one(xb):
        ind = p["I"]
        hh = _mha_ref(ind, xb, p["wq1"], p["wk1"], p["wv1"], p["bq1"], p["bk1"],
                      p["bv1"], p["wo1"], p["bo1"], H_HEADS)
        hh = _layernorm(hh + ind, p["g1"], p["be1"])
        z = _mha_ref(xb, hh, p["wq2"], p["wk2"], p["wv2"], p["bq2"], p["bk2"],
                     p["bv2"], p["wo2"], p["bo2"], H_HEADS)
        z = _layernorm(z + xb, p["g2"], p["be2"])
        f = jnp.dot(z, p["w1"].T) + p["b1"]
        f = _gelu_exact(f)
        f = jnp.dot(f, p["w2"].T) + p["b2"]
        return _layernorm(z + f, p["g3"], p["be3"])
    return jax.vmap(one)(x)


if __name__ == "__main__":
    key = jax.random.PRNGKey(0)
    kx, kp = jax.random.split(key)
    x = jax.random.normal(kx, (B_BATCH, N_SET, D_MODEL), jnp.float32)
    params = make_params(kp)
    slab = pack_params(params)

    y = jax.block_until_ready(induced_set_attention_block(x, slab))
    y_ref = jax.block_until_ready(reference_forward(x, params))

    assert y.shape == (B_BATCH, N_SET, D_MODEL)
    max_err = float(jnp.max(jnp.abs(y - y_ref)))
    assert max_err < 2e-2, f"mismatch vs reference: {max_err}"

    print("KERNEL_OK")
</pallas_src>

<mosaic_0001>
module attributes {stable_mosaic.version = 11 : i64} {
  func.func @isab_kernel(%arg0: memref<16x32xf32, #tpu.memory_space<vmem>>, %arg1: memref<560x128xf32, #tpu.memory_space<vmem>>, %arg2: memref<16x32xf32, #tpu.memory_space<vmem>>) attributes {dimension_semantics = [], scalar_prefetch = 0 : i64, scratch_operands = 0 : i64, tpu.core_type = #tpu.core_type<tc>} {
    %c0 = arith.constant 0 : index
    %c0_0 = arith.constant 0 : index
    %0 = vector.load %arg0[%c0, %c0_0] : memref<16x32xf32, #tpu.memory_space<vmem>>, vector<16x32xf32>
    %c0_1 = arith.constant 0 : index
    %c0_2 = arith.constant 0 : index
    %1 = vector.load %arg1[%c0_1, %c0_2] : memref<560x128xf32, #tpu.memory_space<vmem>>, vector<32x96xf32>
    %cst = arith.constant dense<0.000000e+00> : vector<16x96xf32>
    %2 = tpu.matmul %0, %1, %cst {dimension_numbers = #tpu.dot_dimension_numbers<[1], [0], [0], [1], [0, 0, 1, 1], [], []>} : vector<16x32xf32>, vector<32x96xf32>, vector<16x96xf32> -> vector<16x96xf32>
    %c544 = arith.constant 544 : index
    %c0_3 = arith.constant 0 : index
    %3 = vector.load %arg1[%c544, %c0_3] : memref<560x128xf32, #tpu.memory_space<vmem>>, vector<1x96xf32>
    %4 = vector.broadcast %3 : vector<1x96xf32> to vector<16x96xf32>
    %5 = arith.addf %2, %4 : vector<16x96xf32>
    %6 = vector.extract_strided_slice %5 {offsets = [0, 0], sizes = [16, 32], strides = [1, 1]} : vector<16x96xf32> to vector<16x32xf32>
    %7 = vector.extract_strided_slice %5 {offsets = [0, 32], sizes = [16, 32], strides = [1, 1]} : vector<16x96xf32> to vector<16x32xf32>
    %8 = vector.extract_strided_slice %5 {offsets = [0, 64], sizes = [16, 32], strides = [1, 1]} : vector<16x96xf32> to vector<16x32xf32>
    %c352 = arith.constant 352 : index
    %c0_4 = arith.constant 0 : index
    %9 = vector.load %arg1[%c352, %c0_4] : memref<560x128xf32, #tpu.memory_space<vmem>>, vector<32x32xf32>
    %c320 = arith.constant 320 : index
    %c0_5 = arith.constant 0 : index
    %10 = vector.load %arg1[%c320, %c0_5] : memref<560x128xf32, #tpu.memory_space<vmem>>, vector<32x32xf32>
    %c32 = arith.constant 32 : index
    %c0_6 = arith.constant 0 : index
    %11 = vector.load %arg1[%c32, %c0_6] : memref<560x128xf32, #tpu.memory_space<vmem>>, vector<32x32xf32>
    %cst_7 = arith.constant dense<0.000000e+00> : vector<32x32xf32>
    %12 = tpu.matmul %10, %11, %cst_7 {dimension_numbers = #tpu.dot_dimension_numbers<[1], [0], [0], [1], [0, 0, 1, 1], [], []>} : vector<32x32xf32>, vector<32x32xf32>, vector<32x32xf32> -> vector<32x32xf32>
    %c545 = arith.constant 545 : index
    %c0_8 = arith.constant 0 : index
    %13 = vector.load %arg1[%c545, %c0_8] : memref<560x128xf32, #tpu.memory_space<vmem>>, vector<1x32xf32>
    %14 = vector.broadcast %13 : vector<1x32xf32> to vector<32x32xf32>
    %15 = arith.addf %12, %14 : vector<32x32xf32>
    %16 = arith.mulf %15, %9 : vector<32x32xf32>
    "tpu.trace_start"() <{level = 10 : i32, message = "qd,kd->qk"}> : () -> ()
    %cst_9 = arith.constant dense<0.000000e+00> : vector<32x16xf32>
    %17 = tpu.matmul %16, %6, %cst_9 {dimension_numbers = #tpu.dot_dimension_numbers<[1], [1], [0], [0], [0, 0, 1, 0], [], []>} : vector<32x32xf32>, vector<16x32xf32>, vector<32x16xf32> -> vector<32x16xf32>
    "tpu.trace_stop"() : () -> ()
    %c448 = arith.constant 448 : index
    %c0_10 = arith.constant 0 : index
    %18 = vector.load %arg1[%c448, %c0_10] : memref<560x128xf32, #tpu.memory_space<vmem>>, vector<32x16xf32>
    %19 = arith.addf %17, %18 : vector<32x16xf32>
    %cst_11 = arith.constant dense<0xFF800000> : vector<32xf32>
    %20 = vector.multi_reduction <maximumf>, %19, %cst_11 [1] : vector<32x16xf32> to vector<32xf32>
    %21 = vector.shape_cast %20 : vector<32xf32> to vector<32x1xf32>
    %22 = vector.broadcast %21 : vector<32x1xf32> to vector<32x16xf32>
    %23 = arith.subf %19, %22 : vector<32x16xf32>
    %24 = math.exp %23 : vector<32x16xf32>
    %cst_12 = arith.constant dense<0.000000e+00> : vector<32xf32>
    %25 = vector.multi_reduction <add>, %24, %cst_12 [1] : vector<32x16xf32> to vector<32xf32>
    %26 = vector.shape_cast %25 : vector<32xf32> to vector<32x1xf32>
    %27 = vector.broadcast %26 : vector<32x1xf32> to vector<32x16xf32>
    %28 = arith.divf %24, %27 : vector<32x16xf32>
    %cst_13 = arith.constant dense<0.000000e+00> : vector<32x32xf32>
    %29 = tpu.matmul %28, %7, %cst_13 {dimension_numbers = #tpu.dot_dimension_numbers<[1], [0], [0], [1], [0, 0, 1, 1], [], []>} : vector<32x16xf32>, vector<16x32xf32>, vector<32x32xf32> -> vector<32x32xf32>
    %30 = vector.extract_strided_slice %29 {offsets = [0, 0], sizes = [8, 32], strides = [1, 1]} : vector<32x32xf32> to vector<8x32xf32>
    %31 = vector.extract_strided_slice %9 {offsets = [0, 0], sizes = [1, 32], strides = [1, 1]} : vector<32x32xf32> to vector<1x32xf32>
    %32 = vector.broadcast %31 : vector<1x32xf32> to vector<8x32xf32>
    %33 = arith.mulf %30, %32 : vector<8x32xf32>
    %cst_14 = arith.constant 0.000000e+00 : f32
    %34 = vector.broadcast %cst_14 : f32 to vector<8x32xf32>
    %35 = arith.addf %34, %33 : vector<8x32xf32>
    %36 = vector.extract_strided_slice %29 {offsets = [8, 0], sizes = [8, 32], strides = [1, 1]} : vector<32x32xf32> to vector<8x32xf32>
    %37 = vector.extract_strided_slice %9 {offsets = [8, 0], sizes = [1, 32], strides = [1, 1]} : vector<32x32xf32> to vector<1x32xf32>
    %38 = vector.broadcast %37 : vector<1x32xf32> to vector<8x32xf32>
    %39 = arith.mulf %36, %38 : vector<8x32xf32>
    %40 = arith.addf %35, %39 : vector<8x32xf32>
    %41 = vector.extract_strided_slice %29 {offsets = [16, 0], sizes = [8, 32], strides = [1, 1]} : vector<32x32xf32> to vector<8x32xf32>
    %42 = vector.extract_strided_slice %9 {offsets = [16, 0], sizes = [1, 32], strides = [1, 1]} : vector<32x32xf32> to vector<1x32xf32>
    %43 = vector.broadcast %42 : vector<1x32xf32> to vector<8x32xf32>
    %44 = arith.mulf %41, %43 : vector<8x32xf32>
    %45 = arith.addf %40, %44 : vector<8x32xf32>
    %46 = vector.extract_strided_slice %29 {offsets = [24, 0], sizes = [8, 32], strides = [1, 1]} : vector<32x32xf32> to vector<8x32xf32>
    %47 = vector.extract_strided_slice %9 {offsets = [24, 0], sizes = [1, 32], strides = [1, 1]} : vector<32x32xf32> to vector<1x32xf32>
    %48 = vector.broadcast %47 : vector<1x32xf32> to vector<8x32xf32>
    %49 = arith.mulf %46, %48 : vector<8x32xf32>
    %50 = arith.addf %45, %49 : vector<8x32xf32>
    %c64 = arith.constant 64 : index
    %c0_15 = arith.constant 0 : index
    %51 = vector.load %arg1[%c64, %c0_15] : memref<560x128xf32, #tpu.memory_space<vmem>>, vector<32x32xf32>
    %cst_16 = arith.constant dense<0.000000e+00> : vector<8x32xf32>
    %52 = tpu.matmul %50, %51, %cst_16 {dimension_numbers = #tpu.dot_dimension_numbers<[1], [0], [0], [1], [0, 0, 1, 1], [], []>} : vector<8x32xf32>, vector<32x32xf32>, vector<8x32xf32> -> vector<8x32xf32>
    %c546 = arith.constant 546 : index
    %c0_17 = arith.constant 0 : index
    %53 = vector.load %arg1[%c546, %c0_17] : memref<560x128xf32, #tpu.memory_space<vmem>>, vector<1x32xf32>
    %54 = vector.broadcast %53 : vector<1x32xf32> to vector<8x32xf32>
    %55 = arith.addf %52, %54 : vector<8x32xf32>
    %56 = vector.extract_strided_slice %10 {offsets = [0, 0], sizes = [8, 32], strides = [1, 1]} : vector<32x32xf32> to vector<8x32xf32>
    %57 = arith.addf %55, %56 : vector<8x32xf32>
    %c551 = arith.constant 551 : index
    %c0_18 = arith.constant 0 : index
    %58 = vector.load %arg1[%c551, %c0_18] : memref<560x128xf32, #tpu.memory_space<vmem>>, vector<1x32xf32>
    %c552 = arith.constant 552 : index
    %c0_19 = arith.constant 0 : index
    %59 = vector.load %arg1[%c552, %c0_19] : memref<560x128xf32, #tpu.memory_space<vmem>>, vector<1x32xf32>
    %cst_20 = arith.constant dense<0.000000e+00> : vector<8xf32>
    %60 = vector.multi_reduction <add>, %57, %cst_20 [1] : vector<8x32xf32> to vector<8xf32>
    %61 = vector.shape_cast %60 : vector<8xf32> to vector<8x1xf32>
    %cst_21 = arith.constant 3.200000e+01 : f32
    %62 = vector.broadcast %cst_21 : f32 to vector<8x1xf32>
    %63 = arith.divf %61, %62 : vector<8x1xf32>
    %64 = vector.broadcast %63 : vector<8x1xf32> to vector<8x32xf32>
    %65 = arith.subf %57, %64 : vector<8x32xf32>
    %66 = arith.mulf %65, %65 : vector<8x32xf32>
    %cst_22 = arith.constant dense<0.000000e+00> : vector<8xf32>
    %67 = vector.multi_reduction <add>, %66, %cst_22 [1] : vector<8x32xf32> to vector<8xf32>
    %68 = vector.shape_cast %67 : vector<8xf32> to vector<8x1xf32>
    %cst_23 = arith.constant 3.200000e+01 : f32
    %69 = vector.broadcast %cst_23 : f32 to vector<8x1xf32>
    %70 = arith.divf %68, %69 : vector<8x1xf32>
    %cst_24 = arith.constant 9.99999974E-6 : f32
    %71 = vector.broadcast %cst_24 : f32 to vector<8x1xf32>
    %72 = arith.addf %70, %71 : vector<8x1xf32>
    %73 = math.rsqrt %72 : vector<8x1xf32>
    %74 = vector.broadcast %73 : vector<8x1xf32> to vector<8x32xf32>
    %75 = arith.mulf %65, %74 : vector<8x32xf32>
    %76 = vector.broadcast %58 : vector<1x32xf32> to vector<8x32xf32>
    %77 = arith.mulf %75, %76 : vector<8x32xf32>
    %78 = vector.broadcast %59 : vector<1x32xf32> to vector<8x32xf32>
    %79 = arith.addf %77, %78 : vector<8x32xf32>
    %c96 = arith.constant 96 : index
    %c0_25 = arith.constant 0 : index
    %80 = vector.load %arg1[%c96, %c0_25] : memref<560x128xf32, #tpu.memory_space<vmem>>, vector<32x64xf32>
    %cst_26 = arith.constant dense<0.000000e+00> : vector<8x64xf32>
    %81 = tpu.matmul %79, %80, %cst_26 {dimension_numbers = #tpu.dot_dimension_numbers<[1], [0], [0], [1], [0, 0, 1, 1], [], []>} : vector<8x32xf32>, vector<32x64xf32>, vector<8x64xf32> -> vector<8x64xf32>
    %c547 = arith.constant 547 : index
    %c0_27 = arith.constant 0 : index
    %82 = vector.load %arg1[%c547, %c0_27] : memref<560x128xf32, #tpu.memory_space<vmem>>, vector<1x64xf32>
    %83 = vector.broadcast %82 : vector<1x64xf32> to vector<8x64xf32>
    %84 = arith.addf %81, %83 : vector<8x64xf32>
    %85 = vector.extract_strided_slice %84 {offsets = [0, 0], sizes = [8, 32], strides = [1, 1]} : vector<8x64xf32> to vector<8x32xf32>
    %86 = vector.extract_strided_slice %84 {offsets = [0, 32], sizes = [8, 32], strides = [1, 1]} : vector<8x64xf32> to vector<8x32xf32>
    %c384 = arith.constant 384 : index
    %c0_28 = arith.constant 0 : index
    %87 = vector.load %arg1[%c384, %c0_28] : memref<560x128xf32, #tpu.memory_space<vmem>>, vector<64x32xf32>
    %88 = tpu.concatenate %8, %8, %8, %8 in 0 : vector<16x32xf32>, vector<16x32xf32>, vector<16x32xf32>, vector<16x32xf32> -> vector<64x32xf32>
    %89 = arith.mulf %88, %87 : vector<64x32xf32>
    "tpu.trace_start"() <{level = 10 : i32, message = "qd,kd->qk"}> : () -> ()
    %cst_29 = arith.constant dense<0.000000e+00> : vector<64x8xf32>
    %90 = tpu.matmul %89, %85, %cst_29 {dimension_numbers = #tpu.dot_dimension_numbers<[1], [1], [0], [0], [0, 0, 1, 0], [], []>} : vector<64x32xf32>, vector<8x32xf32>, vector<64x8xf32> -> vector<64x8xf32>
    "tpu.trace_stop"() : () -> ()
    %c480 = arith.constant 480 : index
    %c0_30 = arith.constant 0 : index
    %91 = vector.load %arg1[%c480, %c0_30] : memref<560x128xf32, #tpu.memory_space<vmem>>, vector<64x8xf32>
    %92 = arith.addf %90, %91 : vector<64x8xf32>
    %cst_31 = arith.constant dense<0xFF800000> : vector<64xf32>
    %93 = vector.multi_reduction <maximumf>, %92, %cst_31 [1] : vector<64x8xf32> to vector<64xf32>
    %94 = vector.shape_cast %93 : vector<64xf32> to vector<64x1xf32>
    %95 = vector.broadcast %94 : vector<64x1xf32> to vector<64x8xf32>
    %96 = arith.subf %92, %95 : vector<64x8xf32>
    %97 = math.exp %96 : vector<64x8xf32>
    %cst_32 = arith.constant dense<0.000000e+00> : vector<64xf32>
    %98 = vector.multi_reduction <add>, %97, %cst_32 [1] : vector<64x8xf32> to vector<64xf32>
    %99 = vector.shape_cast %98 : vector<64xf32> to vector<64x1xf32>
    %100 = vector.broadcast %99 : vector<64x1xf32> to vector<64x8xf32>
    %101 = arith.divf %97, %100 : vector<64x8xf32>
    %cst_33 = arith.constant dense<0.000000e+00> : vector<64x32xf32>
    %102 = tpu.matmul %101, %86, %cst_33 {dimension_numbers = #tpu.dot_dimension_numbers<[1], [0], [0], [1], [0, 0, 1, 1], [], []>} : vector<64x8xf32>, vector<8x32xf32>, vector<64x32xf32> -> vector<64x32xf32>
    %103 = vector.extract_strided_slice %102 {offsets = [0, 0], sizes = [16, 32], strides = [1, 1]} : vector<64x32xf32> to vector<16x32xf32>
    %104 = vector.extract_strided_slice %87 {offsets = [0, 0], sizes = [1, 32], strides = [1, 1]} : vector<64x32xf32> to vector<1x32xf32>
    %105 = vector.broadcast %104 : vector<1x32xf32> to vector<16x32xf32>
    %106 = arith.mulf %103, %105 : vector<16x32xf32>
    %cst_34 = arith.constant 0.000000e+00 : f32
    %107 = vector.broadcast %cst_34 : f32 to vector<16x32xf32>
    %108 = arith.addf %107, %106 : vector<16x32xf32>
    %109 = vector.extract_strided_slice %102 {offsets = [16, 0], sizes = [16, 32], strides = [1, 1]} : vector<64x32xf32> to vector<16x32xf32>
    %110 = vector.extract_strided_slice %87 {offsets = [16, 0], sizes = [1, 32], strides = [1, 1]} : vector<64x32xf32> to vector<1x32xf32>
    %111 = vector.broadcast %110 : vector<1x32xf32> to vector<16x32xf32>
    %112 = arith.mulf %109, %111 : vector<16x32xf32>
    %113 = arith.addf %108, %112 : vector<16x32xf32>
    %114 = vector.extract_strided_slice %102 {offsets = [32, 0], sizes = [16, 32], strides = [1, 1]} : vector<64x32xf32> to vector<16x32xf32>
    %115 = vector.extract_strided_slice %87 {offsets = [32, 0], sizes = [1, 32], strides = [1, 1]} : vector<64x32xf32> to vector<1x32xf32>
    %116 = vector.broadcast %115 : vector<1x32xf32> to vector<16x32xf32>
    %117 = arith.mulf %114, %116 : vector<16x32xf32>
    %118 = arith.addf %113, %117 : vector<16x32xf32>
    %119 = vector.extract_strided_slice %102 {offsets = [48, 0], sizes = [16, 32], strides = [1, 1]} : vector<64x32xf32> to vector<16x32xf32>
    %120 = vector.extract_strided_slice %87 {offsets = [48, 0], sizes = [1, 32], strides = [1, 1]} : vector<64x32xf32> to vector<1x32xf32>
    %121 = vector.broadcast %120 : vector<1x32xf32> to vector<16x32xf32>
    %122 = arith.mulf %119, %121 : vector<16x32xf32>
    %123 = arith.addf %118, %122 : vector<16x32xf32>
    %c128 = arith.constant 128 : index
    %c0_35 = arith.constant 0 : index
    %124 = vector.load %arg1[%c128, %c0_35] : memref<560x128xf32, #tpu.memory_space<vmem>>, vector<32x32xf32>
    %cst_36 = arith.constant dense<0.000000e+00> : vector<16x32xf32>
    %125 = tpu.matmul %123, %124, %cst_36 {dimension_numbers = #tpu.dot_dimension_numbers<[1], [0], [0], [1], [0, 0, 1, 1], [], []>} : vector<16x32xf32>, vector<32x32xf32>, vector<16x32xf32> -> vector<16x32xf32>
    %c548 = arith.constant 548 : index
    %c0_37 = arith.constant 0 : index
    %126 = vector.load %arg1[%c548, %c0_37] : memref<560x128xf32, #tpu.memory_space<vmem>>, vector<1x32xf32>
    %127 = vector.broadcast %126 : vector<1x32xf32> to vector<16x32xf32>
    %128 = arith.addf %125, %127 : vector<16x32xf32>
    %129 = arith.addf %128, %0 : vector<16x32xf32>
    %c553 = arith.constant 553 : index
    %c0_38 = arith.constant 0 : index
    %130 = vector.load %arg1[%c553, %c0_38] : memref<560x128xf32, #tpu.memory_space<vmem>>, vector<1x32xf32>
    %c554 = arith.constant 554 : index
    %c0_39 = arith.constant 0 : index
    %131 = vector.load %arg1[%c554, %c0_39] : memref<560x128xf32, #tpu.memory_space<vmem>>, vector<1x32xf32>
    %cst_40 = arith.constant dense<0.000000e+00> : vector<16xf32>
    %132 = vector.multi_reduction <add>, %129, %cst_40 [1] : vector<16x32xf32> to vector<16xf32>
    %133 = vector.shape_cast %132 : vector<16xf32> to vector<16x1xf32>
    %cst_41 = arith.constant 3.200000e+01 : f32
    %134 = vector.broadcast %cst_41 : f32 to vector<16x1xf32>
    %135 = arith.divf %133, %134 : vector<16x1xf32>
    %136 = vector.broadcast %135 : vector<16x1xf32> to vector<16x32xf32>
    %137 = arith.subf %129, %136 : vector<16x32xf32>
    %138 = arith.mulf %137, %137 : vector<16x32xf32>
    %cst_42 = arith.constant dense<0.000000e+00> : vector<16xf32>
    %139 = vector.multi_reduction <add>, %138, %cst_42 [1] : vector<16x32xf32> to vector<16xf32>
    %140 = vector.shape_cast %139 : vector<16xf32> to vector<16x1xf32>
    %cst_43 = arith.constant 3.200000e+01 : f32
    %141 = vector.broadcast %cst_43 : f32 to vector<16x1xf32>
    %142 = arith.divf %140, %141 : vector<16x1xf32>
    %cst_44 = arith.constant 9.99999974E-6 : f32
    %143 = vector.broadcast %cst_44 : f32 to vector<16x1xf32>
    %144 = arith.addf %142, %143 : vector<16x1xf32>
    %145 = math.rsqrt %144 : vector<16x1xf32>
    %146 = vector.broadcast %145 : vector<16x1xf32> to vector<16x32xf32>
    %147 = arith.mulf %137, %146 : vector<16x32xf32>
    %148 = vector.broadcast %130 : vector<1x32xf32> to vector<16x32xf32>
    %149 = arith.mulf %147, %148 : vector<16x32xf32>
    %150 = vector.broadcast %131 : vector<1x32xf32> to vector<16x32xf32>
    %151 = arith.addf %149, %150 : vector<16x32xf32>
    %c160 = arith.constant 160 : index
    %c0_45 = arith.constant 0 : index
    %152 = vector.load %arg1[%c160, %c0_45] : memref<560x128xf32, #tpu.memory_space<vmem>>, vector<32x128xf32>
    %cst_46 = arith.constant dense<0.000000e+00> : vector<16x128xf32>
    %153 = tpu.matmul %151, %152, %cst_46 {dimension_numbers = #tpu.dot_dimension_numbers<[1], [0], [0], [1], [0, 0, 1, 1], [], []>} : vector<16x32xf32>, vector<32x128xf32>, vector<16x128xf32> -> vector<16x128xf32>
    %c549 = arith.constant 549 : index
    %c0_47 = arith.constant 0 : index
    %154 = vector.load %arg1[%c549, %c0_47] : memref<560x128xf32, #tpu.memory_space<vmem>>, vector<1x128xf32>
    %155 = vector.broadcast %154 : vector<1x128xf32> to vector<16x128xf32>
    %156 = arith.addf %153, %155 : vector<16x128xf32>
    %cst_48 = arith.constant 5.000000e-01 : f32
    %157 = vector.broadcast %cst_48 : f32 to vector<16x128xf32>
    %158 = arith.mulf %157, %156 : vector<16x128xf32>
    %cst_49 = arith.constant 0.707106769 : f32
    %159 = vector.broadcast %cst_49 : f32 to vector<16x128xf32>
    %160 = arith.mulf %156, %159 : vector<16x128xf32>
    %161 = math.erf %160 : vector<16x128xf32>
    %cst_50 = arith.constant 1.000000e+00 : f32
    %162 = vector.broadcast %cst_50 : f32 to vector<16x128xf32>
    %163 = arith.addf %162, %161 : vector<16x128xf32>
    %164 = arith.mulf %158, %163 : vector<16x128xf32>
    %c192 = arith.constant 192 : index
    %c0_51 = arith.constant 0 : index
    %165 = vector.load %arg1[%c192, %c0_51] : memref<560x128xf32, #tpu.memory_space<vmem>>, vector<128x32xf32>
    %cst_52 = arith.constant dense<0.000000e+00> : vector<16x32xf32>
    %166 = tpu.matmul %164, %165, %cst_52 {dimension_numbers = #tpu.dot_dimension_numbers<[1], [0], [0], [1], [0, 0, 1, 1], [], []>} : vector<16x128xf32>, vector<128x32xf32>, vector<16x32xf32> -> vector<16x32xf32>
    %c550 = arith.constant 550 : index
    %c0_53 = arith.constant 0 : index
    %167 = vector.load %arg1[%c550, %c0_53] : memref<560x128xf32, #tpu.memory_space<vmem>>, vector<1x32xf32>
    %168 = vector.broadcast %167 : vector<1x32xf32> to vector<16x32xf32>
    %169 = arith.addf %166, %168 : vector<16x32xf32>
    %170 = arith.addf %151, %169 : vector<16x32xf32>
    %c555 = arith.constant 555 : index
    %c0_54 = arith.constant 0 : index
    %171 = vector.load %arg1[%c555, %c0_54] : memref<560x128xf32, #tpu.memory_space<vmem>>, vector<1x32xf32>
    %c556 = arith.constant 556 : index
    %c0_55 = arith.constant 0 : index
    %172 = vector.load %arg1[%c556, %c0_55] : memref<560x128xf32, #tpu.memory_space<vmem>>, vector<1x32xf32>
    %cst_56 = arith.constant dense<0.000000e+00> : vector<16xf32>
    %173 = vector.multi_reduction <add>, %170, %cst_56 [1] : vector<16x32xf32> to vector<16xf32>
    %174 = vector.shape_cast %173 : vector<16xf32> to vector<16x1xf32>
    %cst_57 = arith.constant 3.200000e+01 : f32
    %175 = vector.broadcast %cst_57 : f32 to vector<16x1xf32>
    %176 = arith.divf %174, %175 : vector<16x1xf32>
    %177 = vector.broadcast %176 : vector<16x1xf32> to vector<16x32xf32>
    %178 = arith.subf %170, %177 : vector<16x32xf32>
    %179 = arith.mulf %178, %178 : vector<16x32xf32>
    %cst_58 = arith.constant dense<0.000000e+00> : vector<16xf32>
    %180 = vector.multi_reduction <add>, %179, %cst_58 [1] : vector<16x32xf32> to vector<16xf32>
    %181 = vector.shape_cast %180 : vector<16xf32> to vector<16x1xf32>
    %cst_59 = arith.constant 3.200000e+01 : f32
    %182 = vector.broadcast %cst_59 : f32 to vector<16x1xf32>
    %183 = arith.divf %181, %182 : vector<16x1xf32>
    %cst_60 = arith.constant 9.99999974E-6 : f32
    %184 = vector.broadcast %cst_60 : f32 to vector<16x1xf32>
    %185 = arith.addf %183, %184 : vector<16x1xf32>
    %186 = math.rsqrt %185 : vector<16x1xf32>
    %187 = vector.broadcast %186 : vector<16x1xf32> to vector<16x32xf32>
    %188 = arith.mulf %178, %187 : vector<16x32xf32>
    %189 = vector.broadcast %171 : vector<1x32xf32> to vector<16x32xf32>
    %190 = arith.mulf %188, %189 : vector<16x32xf32>
    %191 = vector.broadcast %172 : vector<1x32xf32> to vector<16x32xf32>
    %192 = arith.addf %190, %191 : vector<16x32xf32>
    %c0_61 = arith.constant 0 : index
    %c0_62 = arith.constant 0 : index
    %193 = vector.load %arg2[%c0_61, %c0_62] : memref<16x32xf32, #tpu.memory_space<vmem>>, vector<16x32xf32>
    tpu.vector_store %arg2[%c0_61, %c0_62], %192 {strides = array<i32>} : memref<16x32xf32, #tpu.memory_space<vmem>>, vector<16x32xf32>,
    return
  }
}

</mosaic_0001>

<llo_original>
// kernel: tpu_custom_call.1
$region0: #{tpu_custom_call.1}
  #allocation0 [shape = 'u32[]', space=smem, size = 0x4, offset = 0x4, fixed_abs, tag = 'smem constant byte address 0x4 - core index']
  #allocation1 [shape = 'u32[72,128]{1,0:T(1,128)}', space=vmem, size = 0x9000, scoped, tag = 'internal scratch']
  %s0 = inlined_call_operand.hbm [shape: f32[16,32], index: 0, kind: input, shape index: {}]
  %s1 = inlined_call_operand.hbm [shape: f32[560,128], index: 1, kind: input, shape index: {}]
  %s2 = inlined_call_operand.hbm [shape: f32[16,32], index: 2, kind: output, shape index: {}]
  %s3 = sld [smem:[#allocation0]]
  $region26: #{tpu_custom_call.1} parent=0
    _
  %s5 = ssub.s32 1, %s3
  %s6 = scalar_select 0, %s5, %s3
  $region1: #{tpu_custom_call.1} parent=0
    #allocation2 [shape = 'u8[8192]{0}', space=vmem, size = 0x2000, scoped, tag = 'input window, operand 0, single buffered']
    #allocation3 [shape = 's32[1]{0}', space=sflag, size = 0x4, scoped, tag = 'scoped memory for tpu_custom_call.1']
    #allocation4 [shape = 's32[1]{0}', space=sflag, size = 0x4, scoped, tag = 'scoped memory for tpu_custom_call.1']
    #allocation5 [shape = 'u8[286720]{0}', space=vmem, size = 0x46000, scoped, tag = 'input window, operand 1, single buffered']
    #allocation6 [shape = 's32[1]{0}', space=sflag, size = 0x4, scoped, tag = 'scoped memory for tpu_custom_call.1']
    #allocation7 [shape = 'u8[8192]{0}', space=vmem, size = 0x2000, scoped, tag = 'output window, operand 0, single buffered']
    %7 = vsyncpa [#allocation3], 0
    %8 = vsyncpa [#allocation6], 0
    %9 = vsyncpa [#allocation4], 0
    // Predicated region
    $region2: #{tpu_custom_call.1} parent=1 // pred_check
      _
    $region3: #{tpu_custom_call.1} parent=1 // pred_check_branch
      %11 = sbr.rel (0) target = $region5
    $region4: #{tpu_custom_call.1} parent=1 // pred_region
      %13 = vsyncadd [#allocation3], 0
      %s14 = sshll.u32 %s0, 4
      %s15 = int_to_ptr.hbm [resolvable:$true] %s14
      %s16 = sshll.u32 [#allocation2], 4
      %s17 = int_to_ptr.vmem [resolvable:$true] %s16
      %22 = dma.hbm_to_vmem [thread:$0]  %s15, 256, %s17, [#allocation3], 128, 128, 8
    $region5: #{tpu_custom_call.1} parent=1 // pred_fallthru
      _
    // Predicated region
    $region6: #{tpu_custom_call.1} parent=1 // pred_check
      _
    $region7: #{tpu_custom_call.1} parent=1 // pred_check_branch
      %24 = sbr.rel (0) target = $region9
    $region8: #{tpu_custom_call.1} parent=1 // pred_region
      %26 = vsyncadd [#allocation6], 0
      %s27 = sshll.u32 %s1, 4
      %s28 = int_to_ptr.hbm [resolvable:$true] %s27
      %s29 = sshll.u32 [#allocation5], 4
      %s30 = int_to_ptr.vmem [resolvable:$true] %s29
      %35 = dma.hbm_to_vmem [thread:$0]  %s28, 8960, %s30, [#allocation6], 128, 128, 8
    $region9: #{tpu_custom_call.1} parent=1 // pred_fallthru
      _
    // Predicated region
    $region10: #{tpu_custom_call.1} parent=1 // pred_check
      _
    $region11: #{tpu_custom_call.1} parent=1 // pred_check_branch
      %37 = sbr.rel (0) target = $region13
    $region12: #{tpu_custom_call.1} parent=1 // pred_region
      %39 = dma.done [#allocation3], 256
    $region13: #{tpu_custom_call.1} parent=1 // pred_fallthru
      _
    // Predicated region
    $region14: #{tpu_custom_call.1} parent=1 // pred_check
      _
    $region15: #{tpu_custom_call.1} parent=1 // pred_check_branch
      %41 = sbr.rel (0) target = $region17
    $region16: #{tpu_custom_call.1} parent=1 // pred_region
      %43 = dma.done [#allocation6], 8960
    $region17: #{tpu_custom_call.1} parent=1 // pred_fallthru
      _
    %v44 = vld [vmem:[#allocation2] sm:$0xff]
    %v45 = vld [vmem:[#allocation2 + $0x8] sm:$0xff]
    %v46 = vld [vmem:[#allocation5] sm:$0xff]
    %v47 = vld [vmem:[#allocation5 + $0x8] sm:$0xff]
    %v48 = vld [vmem:[#allocation5 + $0x10] sm:$0xff]
    %v49 = vld [vmem:[#allocation5 + $0x18] sm:$0xff]
    %v50 = vld [vmem:[#allocation5 + $0x220] sm:$0x1]
    %v51 = vperm.slane %v50, 0
    %vm52 = vcmask 261120
    %v54 = vsel %vm52, %v44, 0
    %v57 = vsel %vm52, %v45, 0
    %59 = vmatpush.msra.mxu0 0.0
    %60 = vmatpush.msra.mxu0 0.0
    %61 = vmatpush.msra.mxu0 0.0
    %62 = vmatpush.msra.mxu0 0.0
    %63 = vmatpush.msra.mxu0 0.0
    %64 = vmatpush.msra.mxu0 0.0
    %65 = vmatpush.msra.mxu0 0.0
    %66 = vmatpush.msra.mxu0 0.0
    %67 = vmatpush.msra.mxu0 0.0
    %68 = vmatpush.msra.mxu0 0.0
    %69 = vmatpush.msra.mxu0 0.0
    %70 = vmatpush.msra.mxu0 0.0
    %71 = vmatpush.msra.mxu0 %v49
    %72 = vmatpush.msra.mxu0 %v48
    %73 = vmatpush.msra.mxu0 %v47
    %74 = vmatpush.msra.mxu0 %v46
    %75 = vmatmul.f32.gmra.mxu0 %v54
    %v76 = vpop.f32.mrf.mxu0
    %v77 = vadd.f32 %v51, %v76
    %78 = vmatmul.f32.gmra.mxu0 %v57
    %v79 = vpop.f32.mrf.mxu0
    %v80 = vadd.f32 %v51, %v79
    %81 = vdwg.mxu0
    %v82 = vld [vmem:[#allocation5 + $0x160] sm:$0xff]
    %v83 = vld [vmem:[#allocation5 + $0x168] sm:$0xff]
    %v84 = vld [vmem:[#allocation5 + $0x170] sm:$0xff]
    %v85 = vld [vmem:[#allocation5 + $0x178] sm:$0xff]
    %v86 = vld [vmem:[#allocation5 + $0x140] sm:$0xff]
    %v87 = vld [vmem:[#allocation5 + $0x148] sm:$0xff]
    %v88 = vld [vmem:[#allocation5 + $0x150] sm:$0xff]
    %v89 = vld [vmem:[#allocation5 + $0x158] sm:$0xff]
    %v90 = vld [vmem:[#allocation5 + $0x20] sm:$0xff]
    %v91 = vld [vmem:[#allocation5 + $0x28] sm:$0xff]
    %v92 = vld [vmem:[#allocation5 + $0x30] sm:$0xff]
    %v93 = vld [vmem:[#allocation5 + $0x38] sm:$0xff]
    %v94 = vld [vmem:[#allocation5 + $0x221] sm:$0x1]
    %v95 = vperm.slane %v94, 0
    %v97 = vsel %vm52, %v86, 0
    %v100 = vsel %vm52, %v87, 0
    %v103 = vsel %vm52, %v88, 0
    %v106 = vsel %vm52, %v89, 0
    %108 = vmatpush.msra.mxu0 0.0
    %109 = vmatpush.msra.mxu0 0.0
    %110 = vmatpush.msra.mxu0 0.0
    %111 = vmatpush.msra.mxu0 0.0
    %112 = vmatpush.msra.mxu0 0.0
    %113 = vmatpush.msra.mxu0 0.0
    %114 = vmatpush.msra.mxu0 0.0
    %115 = vmatpush.msra.mxu0 0.0
    %116 = vmatpush.msra.mxu0 0.0
    %117 = vmatpush.msra.mxu0 0.0
    %118 = vmatpush.msra.mxu0 0.0
    %119 = vmatpush.msra.mxu0 0.0
    %120 = vmatpush.msra.mxu0 %v93
    %121 = vmatpush.msra.mxu0 %v92
    %122 = vmatpush.msra.mxu0 %v91
    %123 = vmatpush.msra.mxu0 %v90
    %124 = vmatmul.f32.gmra.mxu0 %v97
    %v125 = vpop.f32.mrf.mxu0
    %v126 = vadd.f32 %v95, %v125
    %127 = vmatmul.f32.gmra.mxu0 %v100
    %v128 = vpop.f32.mrf.mxu0
    %v129 = vadd.f32 %v95, %v128
    %130 = vmatmul.f32.gmra.mxu0 %v103
    %v131 = vpop.f32.mrf.mxu0
    %v132 = vadd.f32 %v95, %v131
    %133 = vmatmul.f32.gmra.mxu0 %v106
    %v134 = vpop.f32.mrf.mxu0
    %v135 = vadd.f32 %v95, %v134
    %136 = vdwg.mxu0
    %v137 = vmul.f32 %v126, %v82
    %v138 = vmul.f32 %v129, %v83
    %v139 = vmul.f32 %v132, %v84
    %v140 = vmul.f32 %v135, %v85
    %v141 = vld [vmem:[#allocation5 + $0x1c0] sm:$0xff]
    %v142 = vld [vmem:[#allocation5 + $0x1c8] sm:$0xff]
    %v143 = vld [vmem:[#allocation5 + $0x1d0] sm:$0xff]
    %v144 = vld [vmem:[#allocation5 + $0x1d8] sm:$0xff]
    %v146 = vsel %vm52, %v137, 0
    %v149 = vsel %vm52, %v138, 0
    %v152 = vsel %vm52, %v139, 0
    %v155 = vsel %vm52, %v140, 0
    %v158 = vsel %vm52, %v77, 0
    %v161 = vsel %vm52, %v80, 0
    %163 = vmatpush.xpose.msra.mxu0 0.0
    %164 = vmatpush.xpose.msra.mxu0 0.0
    %165 = vmatpush.xpose.msra.mxu0 0.0
    %166 = vmatpush.xpose.msra.mxu0 0.0
    %167 = vmatpush.xpose.msra.mxu0 0.0
    %168 = vmatpush.xpose.msra.mxu0 0.0
    %169 = vmatpush.xpose.msra.mxu0 0.0
    %170 = vmatpush.xpose.msra.mxu0 0.0
    %171 = vmatpush.xpose.msra.mxu0 0.0
    %172 = vmatpush.xpose.msra.mxu0 0.0
    %173 = vmatpush.xpose.msra.mxu0 0.0
    %174 = vmatpush.xpose.msra.mxu0 0.0
    %175 = vmatpush.xpose.msra.mxu0 0.0
    %176 = vmatpush.xpose.msra.mxu0 0.0
    %177 = vmatpush.xpose.msra.mxu0 %v161
    %178 = vmatpush.xpose.msra.mxu0 %v158
    %179 = vmatmul.f32.gmra.mxu0 %v146
    %v180 = vpop.f32.mrf.mxu0
    %v181 = vadd.f32 %v141, %v180
    %182 = vmatmul.f32.gmra.mxu0 %v149
    %v183 = vpop.f32.mrf.mxu0
    %v184 = vadd.f32 %v142, %v183
    %185 = vmatmul.f32.gmra.mxu0 %v152
    %v186 = vpop.f32.mrf.mxu0
    %v187 = vadd.f32 %v143, %v186
    %188 = vmatmul.f32.gmra.mxu0 %v155
    %v189 = vpop.f32.mrf.mxu0
    %v190 = vadd.f32 %v144, %v189
    %191 = vdwg.mxu0
    %vm192 = vcmask 130048
    %v193 = vsel %vm192, %v181, -inf
    %194 = vmax.xlane.f32.xlu0 %v193
    %v195 = vpop.xlane.xlu0 %194
    %v196 = vsel %vm192, %v184, -inf
    %197 = vmax.xlane.f32.xlu0 %v196
    %v198 = vpop.xlane.xlu0 %197
    %v199 = vsel %vm192, %v187, -inf
    %200 = vmax.xlane.f32.xlu0 %v199
    %v201 = vpop.xlane.xlu0 %200
    %v202 = vsel %vm192, %v190, -inf
    %203 = vmax.xlane.f32.xlu0 %v202
    %v204 = vpop.xlane.xlu0 %203
    %v205 = vsub.f32 %v181, %v195
    %v206 = vsub.f32 %v184, %v198
    %v207 = vsub.f32 %v187, %v201
    %v208 = vsub.f32 %v190, %v204
    %v209 = vmul.f32 %v205, 1.442695
    %v210 = vpow.pop %v209
    %v211 = vmul.f32 %v206, 1.442695
    %v212 = vpow.pop %v211
    %v213 = vmul.f32 %v207, 1.442695
    %v214 = vpow.pop %v213
    %v215 = vmul.f32 %v208, 1.442695
    %v216 = vpow.pop %v215
    %v217 = vsel %vm192, %v210, 0.0
    %218 = vadd.xlane.f32.xlu0 %v217
    %v219 = vpop.xlane.xlu0 %218
    %v220 = vsel %vm192, %v212, 0.0
    %221 = vadd.xlane.f32.xlu0 %v220
    %v222 = vpop.xlane.xlu0 %221
    %v223 = vsel %vm192, %v214, 0.0
    %224 = vadd.xlane.f32.xlu0 %v223
    %v225 = vpop.xlane.xlu0 %224
    %v226 = vsel %vm192, %v216, 0.0
    %227 = vadd.xlane.f32.xlu0 %v226
    %v228 = vpop.xlane.xlu0 %227
    %v229 = vrcp.pop %v219
    %v230 = vmul.f32 %v219, %v229
    %v231 = vsub.f32 1.0, %v230
    %v232 = vmul.f32 %v229, %v231
    %v233 = vadd.f32 %v229, %v232
    %vm234 = vweird.f32 %v219
    %vm235 = vweird.f32 %v229
    %vm236 = vmor %vm234, %vm235
    %v237 = vsel %vm236, %v229, %v233
    %v238 = vand.u32 2147483647, %v219
    %vm239 = vcmp.eq.f32.partialorder %v238, 8.507059e+37
    %v240 = vand.u32 %v219, 2147483648
    %v241 = vor.u32 1.1754944e-38, %v240
    %v242 = vsel %vm239, %v241, %v237
    %v243 = vmul.f32 %v210, %v242
    %v244 = vrcp.pop %v222
    %v245 = vmul.f32 %v222, %v244
    %v246 = vsub.f32 1.0, %v245
    %v247 = vmul.f32 %v244, %v246
    %v248 = vadd.f32 %v244, %v247
    %vm249 = vweird.f32 %v222
    %vm250 = vweird.f32 %v244
    %vm251 = vmor %vm249, %vm250
    %v252 = vsel %vm251, %v244, %v248
    %v253 = vand.u32 2147483647, %v222
    %vm254 = vcmp.eq.f32.partialorder %v253, 8.507059e+37
    %v255 = vand.u32 %v222, 2147483648
    %v256 = vor.u32 1.1754944e-38, %v255
    %v257 = vsel %vm254, %v256, %v252
    %v258 = vmul.f32 %v212, %v257
    %v259 = vrcp.pop %v225
    %v260 = vmul.f32 %v225, %v259
    %v261 = vsub.f32 1.0, %v260
    %v262 = vmul.f32 %v259, %v261
    %v263 = vadd.f32 %v259, %v262
    %vm264 = vweird.f32 %v225
    %vm265 = vweird.f32 %v259
    %vm266 = vmor %vm264, %vm265
    %v267 = vsel %vm266, %v259, %v263
    %v268 = vand.u32 2147483647, %v225
    %vm269 = vcmp.eq.f32.partialorder %v268, 8.507059e+37
    %v270 = vand.u32 %v225, 2147483648
    %v271 = vor.u32 1.1754944e-38, %v270
    %v272 = vsel %vm269, %v271, %v267
    %v273 = vmul.f32 %v214, %v272
    %v274 = vrcp.pop %v228
    %v275 = vmul.f32 %v228, %v274
    %v276 = vsub.f32 1.0, %v275
    %v277 = vmul.f32 %v274, %v276
    %v278 = vadd.f32 %v274, %v277
    %vm279 = vweird.f32 %v228
    %vm280 = vweird.f32 %v274
    %vm281 = vmor %vm279, %vm280
    %v282 = vsel %vm281, %v274, %v278
    %v283 = vand.u32 2147483647, %v228
    %vm284 = vcmp.eq.f32.partialorder %v283, 8.507059e+37
    %v285 = vand.u32 %v228, 2147483648
    %v286 = vor.u32 1.1754944e-38, %v285
    %v287 = vsel %vm284, %v286, %v282
    %v288 = vmul.f32 %v216, %v287
    %289 = vrot.lane.b32.xlu0 %v77, 96
    %v290 = vpop.permute.xlu0 %289
    %291 = vrot.lane.b32.xlu0 %v80, 96
    %v292 = vpop.permute.xlu0 %291
    %v296 = vsel %vm192, %v243, 0
    %v299 = vsel %vm192, %v258, 0
    %v302 = vsel %vm192, %v273, 0
    %v305 = vsel %vm192, %v288, 0
    %307 = vmatpush.msra.mxu0 0.0
    %308 = vmatpush.msra.mxu0 0.0
    %309 = vmatpush.msra.mxu0 0.0
    %310 = vmatpush.msra.mxu0 0.0
    %311 = vmatpush.msra.mxu0 0.0
    %312 = vmatpush.msra.mxu0 0.0
    %313 = vmatpush.msra.mxu0 0.0
    %314 = vmatpush.msra.mxu0 0.0
    %315 = vmatpush.msra.mxu0 0.0
    %316 = vmatpush.msra.mxu0 0.0
    %317 = vmatpush.msra.mxu0 0.0
    %318 = vmatpush.msra.mxu0 0.0
    %319 = vmatpush.msra.mxu0 0.0
    %320 = vmatpush.msra.mxu0 0.0
    %321 = vmatpush.msra.mxu0 %v292
    %322 = vmatpush.msra.mxu0 %v290
    %323 = vmatmul.f32.gmra.mxu0 %v296
    %v324 = vpop.f32.mrf.mxu0
    %v325 = vadd.f32 0.0, %v324
    %326 = vmatmul.f32.gmra.mxu0 %v299
    %v327 = vpop.f32.mrf.mxu0
    %v328 = vadd.f32 0.0, %v327
    %329 = vmatmul.f32.gmra.mxu0 %v302
    %v330 = vpop.f32.mrf.mxu0
    %v331 = vadd.f32 0.0, %v330
    %332 = vmatmul.f32.gmra.mxu0 %v305
    %v333 = vpop.f32.mrf.mxu0
    %v334 = vadd.f32 0.0, %v333
    %335 = vdwg.mxu0
    %v336 = vperm.slane %v82, 0
    %v337 = vmul.f32 %v325, %v336
    %v338 = vadd.f32 %v337, 0.0
    %v339 = vperm.slane %v83, 0
    %v340 = vmul.f32 %v328, %v339
    %v341 = vadd.f32 %v338, %v340
    %v342 = vperm.slane %v84, 0
    %v343 = vmul.f32 %v331, %v342
    %v344 = vadd.f32 %v341, %v343
    %v345 = vperm.slane %v85, 0
    %v346 = vmul.f32 %v334, %v345
    %v347 = vadd.f32 %v344, %v346
    %v348 = vld [vmem:[#allocation5 + $0x40] sm:$0xff]
    %v349 = vld [vmem:[#allocation5 + $0x48] sm:$0xff]
    %v350 = vld [vmem:[#allocation5 + $0x50] sm:$0xff]
    %v351 = vld [vmem:[#allocation5 + $0x58] sm:$0xff]
    %v352 = vld [vmem:[#allocation5 + $0x222] sm:$0x1]
    %v353 = vperm.slane %v352, 0
    %v355 = vsel %vm52, %v347, 0
    %357 = vmatpush.msra.mxu0 0.0
    %358 = vmatpush.msra.mxu0 0.0
    %359 = vmatpush.msra.mxu0 0.0
    %360 = vmatpush.msra.mxu0 0.0
    %361 = vmatpush.msra.mxu0 0.0
    %362 = vmatpush.msra.mxu0 0.0
    %363 = vmatpush.msra.mxu0 0.0
    %364 = vmatpush.msra.mxu0 0.0
    %365 = vmatpush.msra.mxu0 0.0
    %366 = vmatpush.msra.mxu0 0.0
    %367 = vmatpush.msra.mxu0 0.0
    %368 = vmatpush.msra.mxu0 0.0
    %369 = vmatpush.msra.mxu0 %v351
    %370 = vmatpush.msra.mxu0 %v350
    %371 = vmatpush.msra.mxu0 %v349
    %372 = vmatpush.msra.mxu0 %v348
    %373 = vmatmul.f32.gmra.mxu0 %v355
    %v374 = vpop.f32.mrf.mxu0
    %v375 = vadd.f32 %v353, %v374
    %376 = vdwg.mxu0
    %v377 = vadd.f32 %v375, %v86
    %v378 = vld [vmem:[#allocation5 + $0x227] sm:$0x1]
    %v379 = vld [vmem:[#allocation5 + $0x228] sm:$0x1]
    %v380 = vsel %vm52, %v377, 0.0
    %381 = vadd.xlane.f32.xlu0 %v380
    %v382 = vpop.xlane.xlu0 %381
    %v383 = vrcp.pop 32.0
    %v384 = vmul.f32 32.0, %v383
    %v385 = vsub.f32 1.0, %v384
    %v386 = vmul.f32 %v383, %v385
    %v387 = vadd.f32 %v383, %v386
    %vm388 = vweird.f32 %v383
    %v389 = vsel %vm388, %v383, %v387
    %v390 = vmul.f32 %v382, %v389
    %v391 = vsub.f32 %v377, %v390
    %v392 = vmul.f32 %v391, %v391
    %v393 = vsel %vm52, %v392, 0.0
    %394 = vadd.xlane.f32.xlu0 %v393
    %v395 = vpop.xlane.xlu0 %394
    %v396 = vmul.f32 %v395, %v389
    %v397 = vadd.f32 %v396, 1e-05
    %v398 = vrsqrt.pop %v397
    %v399 = vmul.f32 %v398, %v397
    %v400 = vmul.f32 %v399, %v398
    %v401 = vmul.f32 0.5, %v400
    %v402 = vsub.f32 1.5, %v401
    %v403 = vmul.f32 %v398, %v402
    %vm404 = vweird.f32 %v397
    %vm405 = vweird.f32 %v398
    %vm406 = vmor %vm404, %vm405
    %v407 = vsel %vm406, %v398, %v403
    %v408 = vmul.f32 %v391, %v407
    %v409 = vperm.slane %v378, 0
    %v410 = vmul.f32 %v408, %v409
    %v411 = vperm.slane %v379, 0
    %v412 = vadd.f32 %v410, %v411
    %v413 = vld [vmem:[#allocation5 + $0x60] sm:$0xff]
    %v414 = vld [vmem:[#allocation5 + $0x68] sm:$0xff]
    %v415 = vld [vmem:[#allocation5 + $0x70] sm:$0xff]
    %v416 = vld [vmem:[#allocation5 + $0x78] sm:$0xff]
    %v417 = vld [vmem:[#allocation5 + $0x223] sm:$0x1]
    %v418 = vperm.slane %v417, 0
    %v420 = vsel %vm52, %v412, 0
    %422 = vmatpush.msra.mxu0 0.0
    %423 = vmatpush.msra.mxu0 0.0
    %424 = vmatpush.msra.mxu0 0.0
    %425 = vmatpush.msra.mxu0 0.0
    %426 = vmatpush.msra.mxu0 0.0
    %427 = vmatpush.msra.mxu0 0.0
    %428 = vmatpush.msra.mxu0 0.0
    %429 = vmatpush.msra.mxu0 0.0
    %430 = vmatpush.msra.mxu0 0.0
    %431 = vmatpush.msra.mxu0 0.0
    %432 = vmatpush.msra.mxu0 0.0
    %433 = vmatpush.msra.mxu0 0.0
    %434 = vmatpush.msra.mxu0 %v416
    %435 = vmatpush.msra.mxu0 %v415
    %436 = vmatpush.msra.mxu0 %v414
    %437 = vmatpush.msra.mxu0 %v413
    %438 = vmatmul.f32.gmra.mxu0 %v420
    %v439 = vpop.f32.mrf.mxu0
    %v440 = vadd.f32 %v418, %v439
    %441 = vdwg.mxu0
    %v442 = vld [vmem:[#allocation5 + $0x180] sm:$0xff]
    %v443 = vld [vmem:[#allocation5 + $0x188] sm:$0xff]
    %v444 = vld [vmem:[#allocation5 + $0x190] sm:$0xff]
    %v445 = vld [vmem:[#allocation5 + $0x198] sm:$0xff]
    %v446 = vld [vmem:[#allocation5 + $0x1a0] sm:$0xff]
    %v447 = vld [vmem:[#allocation5 + $0x1a8] sm:$0xff]
    %v448 = vld [vmem:[#allocation5 + $0x1b0] sm:$0xff]
    %v449 = vld [vmem:[#allocation5 + $0x1b8] sm:$0xff]
    %458 = vrot.lane.b32.xlu0 %v442, 64
    %v459 = vpop.permute.xlu0 %458
    %460 = vrot.lane.b32.xlu0 %v443, 64
    %v461 = vpop.permute.xlu0 %460
    %462 = vrot.lane.b32.xlu0 %v444, 64
    %v463 = vpop.permute.xlu0 %462
    %464 = vrot.lane.b32.xlu0 %v445, 64
    %v465 = vpop.permute.xlu0 %464
    %466 = vrot.lane.b32.xlu0 %v446, 64
    %v467 = vpop.permute.xlu0 %466
    %468 = vrot.lane.b32.xlu0 %v447, 64
    %v469 = vpop.permute.xlu0 %468
    %470 = vrot.lane.b32.xlu0 %v448, 64
    %v471 = vpop.permute.xlu0 %470
    %472 = vrot.lane.b32.xlu0 %v449, 64
    %v473 = vpop.permute.xlu0 %472
    %v482 = vmul.f32 %v77, %v459
    %v483 = vmul.f32 %v80, %v461
    %v484 = vmul.f32 %v77, %v463
    %v485 = vmul.f32 %v80, %v465
    %v486 = vmul.f32 %v77, %v467
    %v487 = vmul.f32 %v80, %v469
    %v488 = vmul.f32 %v77, %v471
    %v489 = vmul.f32 %v80, %v473
    %v490 = vld [vmem:[#allocation5 + $0x1e0] sm:$0xff]
    %v491 = vld [vmem:[#allocation5 + $0x1e8] sm:$0xff]
    %v492 = vld [vmem:[#allocation5 + $0x1f0] sm:$0xff]
    %v493 = vld [vmem:[#allocation5 + $0x1f8] sm:$0xff]
    %v494 = vld [vmem:[#allocation5 + $0x200] sm:$0xff]
    %v495 = vld [vmem:[#allocation5 + $0x208] sm:$0xff]
    %v496 = vld [vmem:[#allocation5 + $0x210] sm:$0xff]
    %v497 = vld [vmem:[#allocation5 + $0x218] sm:$0xff]
    %506 = vrot.lane.b32.xlu0 %v482, 64
    %v507 = vpop.permute.xlu0 %506
    %508 = vrot.lane.b32.xlu0 %v483, 64
    %v509 = vpop.permute.xlu0 %508
    %510 = vrot.lane.b32.xlu0 %v484, 64
    %v511 = vpop.permute.xlu0 %510
    %512 = vrot.lane.b32.xlu0 %v485, 64
    %v513 = vpop.permute.xlu0 %512
    %514 = vrot.lane.b32.xlu0 %v486, 64
    %v515 = vpop.permute.xlu0 %514
    %516 = vrot.lane.b32.xlu0 %v487, 64
    %v517 = vpop.permute.xlu0 %516
    %518 = vrot.lane.b32.xlu0 %v488, 64
    %v519 = vpop.permute.xlu0 %518
    %520 = vrot.lane.b32.xlu0 %v489, 64
    %v521 = vpop.permute.xlu0 %520
    %v522 = vsel %vm52, %v507, 0
    %v524 = vsel %vm52, %v509, 0
    %v526 = vsel %vm52, %v511, 0
    %v528 = vsel %vm52, %v513, 0
    %v530 = vsel %vm52, %v515, 0
    %v532 = vsel %vm52, %v517, 0
    %v534 = vsel %vm52, %v519, 0
    %v536 = vsel %vm52, %v521, 0
    %v539 = vsel %vm52, %v440, 0
    %541 = vmatpush.xpose.msra.mxu0 0.0
    %542 = vmatpush.xpose.msra.mxu0 0.0
    %543 = vmatpush.xpose.msra.mxu0 0.0
    %544 = vmatpush.xpose.msra.mxu0 0.0
    %545 = vmatpush.xpose.msra.mxu0 0.0
    %546 = vmatpush.xpose.msra.mxu0 0.0
    %547 = vmatpush.xpose.msra.mxu0 0.0
    %548 = vmatpush.xpose.msra.mxu0 0.0
    %549 = vmatpush.xpose.msra.mxu0 0.0
    %550 = vmatpush.xpose.msra.mxu0 0.0
    %551 = vmatpush.xpose.msra.mxu0 0.0
    %552 = vmatpush.xpose.msra.mxu0 0.0
    %553 = vmatpush.xpose.msra.mxu0 0.0
    %554 = vmatpush.xpose.msra.mxu0 0.0
    %555 = vmatpush.xpose.msra.mxu0 0.0
    %556 = vmatpush.xpose.msra.mxu0 %v539
    %557 = vmatmul.f32.gmra.mxu0 %v522
    %v558 = vpop.f32.mrf.mxu0
    %v559 = vadd.f32 %v490, %v558
    %560 = vmatmul.f32.gmra.mxu0 %v524
    %v561 = vpop.f32.mrf.mxu0
    %v562 = vadd.f32 %v491, %v561
    %563 = vmatmul.f32.gmra.mxu0 %v526
    %v564 = vpop.f32.mrf.mxu0
    %v565 = vadd.f32 %v492, %v564
    %566 = vmatmul.f32.gmra.mxu0 %v528
    %v567 = vpop.f32.mrf.mxu0
    %v568 = vadd.f32 %v493, %v567
    %569 = vmatmul.f32.gmra.mxu0 %v530
    %v570 = vpop.f32.mrf.mxu0
    %v571 = vadd.f32 %v494, %v570
    %572 = vmatmul.f32.gmra.mxu0 %v532
    %v573 = vpop.f32.mrf.mxu0
    %v574 = vadd.f32 %v495, %v573
    %575 = vmatmul.f32.gmra.mxu0 %v534
    %v576 = vpop.f32.mrf.mxu0
    %v577 = vadd.f32 %v496, %v576
    %578 = vmatmul.f32.gmra.mxu0 %v536
    %v579 = vpop.f32.mrf.mxu0
    %v580 = vadd.f32 %v497, %v579
    %581 = vdwg.mxu0
    %vm582 = vcmask 64512
    %v583 = vsel %vm582, %v559, -inf
    %584 = vmax.xlane.f32.xlu0 %v583
    %v585 = vpop.xlane.xlu0 %584
    %v586 = vsel %vm582, %v562, -inf
    %587 = vmax.xlane.f32.xlu0 %v586
    %v588 = vpop.xlane.xlu0 %587
    %v589 = vsel %vm582, %v565, -inf
    %590 = vmax.xlane.f32.xlu0 %v589
    %v591 = vpop.xlane.xlu0 %590
    %v592 = vsel %vm582, %v568, -inf
    %593 = vmax.xlane.f32.xlu0 %v592
    %v594 = vpop.xlane.xlu0 %593
    %v595 = vsel %vm582, %v571, -inf
    %596 = vmax.xlane.f32.xlu0 %v595
    %v597 = vpop.xlane.xlu0 %596
    %v598 = vsel %vm582, %v574, -inf
    %599 = vmax.xlane.f32.xlu0 %v598
    %v600 = vpop.xlane.xlu0 %599
    %v601 = vsel %vm582, %v577, -inf
    %602 = vmax.xlane.f32.xlu0 %v601
    %v603 = vpop.xlane.xlu0 %602
    %v604 = vsel %vm582, %v580, -inf
    %605 = vmax.xlane.f32.xlu0 %v604
    %v606 = vpop.xlane.xlu0 %605
    %v607 = vsub.f32 %v559, %v585
    %v608 = vsub.f32 %v562, %v588
    %v609 = vsub.f32 %v565, %v591
    %v610 = vsub.f32 %v568, %v594
    %v611 = vsub.f32 %v571, %v597
    %v612 = vsub.f32 %v574, %v600
    %v613 = vsub.f32 %v577, %v603
    %v614 = vsub.f32 %v580, %v606
    %v615 = vmul.f32 %v607, 1.442695
    %v616 = vpow.pop %v615
    %v617 = vmul.f32 %v608, 1.442695
    %v618 = vpow.pop %v617
    %v619 = vmul.f32 %v609, 1.442695
    %v620 = vpow.pop %v619
    %v621 = vmul.f32 %v610, 1.442695
    %v622 = vpow.pop %v621
    %v623 = vmul.f32 %v611, 1.442695
    %v624 = vpow.pop %v623
    %v625 = vmul.f32 %v612, 1.442695
    %v626 = vpow.pop %v625
    %v627 = vmul.f32 %v613, 1.442695
    %v628 = vpow.pop %v627
    %v629 = vmul.f32 %v614, 1.442695
    %v630 = vpow.pop %v629
    %v631 = vsel %vm582, %v616, 0.0
    %632 = vadd.xlane.f32.xlu0 %v631
    %v633 = vpop.xlane.xlu0 %632
    %v634 = vsel %vm582, %v618, 0.0
    %635 = vadd.xlane.f32.xlu0 %v634
    %v636 = vpop.xlane.xlu0 %635
    %v637 = vsel %vm582, %v620, 0.0
    %638 = vadd.xlane.f32.xlu0 %v637
    %v639 = vpop.xlane.xlu0 %638
    %v640 = vsel %vm582, %v622, 0.0
    %641 = vadd.xlane.f32.xlu0 %v640
    %v642 = vpop.xlane.xlu0 %641
    %v643 = vsel %vm582, %v624, 0.0
    %644 = vadd.xlane.f32.xlu0 %v643
    %v645 = vpop.xlane.xlu0 %644
    %v646 = vsel %vm582, %v626, 0.0
    %647 = vadd.xlane.f32.xlu0 %v646
    %v648 = vpop.xlane.xlu0 %647
    %v649 = vsel %vm582, %v628, 0.0
    %650 = vadd.xlane.f32.xlu0 %v649
    %v651 = vpop.xlane.xlu0 %650
    %v652 = vsel %vm582, %v630, 0.0
    %653 = vadd.xlane.f32.xlu0 %v652
    %v654 = vpop.xlane.xlu0 %653
    %v655 = vrcp.pop %v633
    %v656 = vmul.f32 %v633, %v655
    %v657 = vsub.f32 1.0, %v656
    %v658 = vmul.f32 %v655, %v657
    %v659 = vadd.f32 %v655, %v658
    %vm660 = vweird.f32 %v633
    %vm661 = vweird.f32 %v655
    %vm662 = vmor %vm660, %vm661
    %v663 = vsel %vm662, %v655, %v659
    %v664 = vand.u32 2147483647, %v633
    %vm665 = vcmp.eq.f32.partialorder %v664, 8.507059e+37
    %v666 = vand.u32 %v633, 2147483648
    %v667 = vor.u32 1.1754944e-38, %v666
    %v668 = vsel %vm665, %v667, %v663
    %v669 = vmul.f32 %v616, %v668
    %v670 = vrcp.pop %v636
    %v671 = vmul.f32 %v636, %v670
    %v672 = vsub.f32 1.0, %v671
    %v673 = vmul.f32 %v670, %v672
    %v674 = vadd.f32 %v670, %v673
    %vm675 = vweird.f32 %v636
    %vm676 = vweird.f32 %v670
    %vm677 = vmor %vm675, %vm676
    %v678 = vsel %vm677, %v670, %v674
    %v679 = vand.u32 2147483647, %v636
    %vm680 = vcmp.eq.f32.partialorder %v679, 8.507059e+37
    %v681 = vand.u32 %v636, 2147483648
    %v682 = vor.u32 1.1754944e-38, %v681
    %v683 = vsel %vm680, %v682, %v678
    %v684 = vmul.f32 %v618, %v683
    %v685 = vrcp.pop %v639
    %v686 = vmul.f32 %v639, %v685
    %v687 = vsub.f32 1.0, %v686
    %v688 = vmul.f32 %v685, %v687
    %v689 = vadd.f32 %v685, %v688
    %vm690 = vweird.f32 %v639
    %vm691 = vweird.f32 %v685
    %vm692 = vmor %vm690, %vm691
    %v693 = vsel %vm692, %v685, %v689
    %v694 = vand.u32 2147483647, %v639
    %vm695 = vcmp.eq.f32.partialorder %v694, 8.507059e+37
    %v696 = vand.u32 %v639, 2147483648
    %v697 = vor.u32 1.1754944e-38, %v696
    %v698 = vsel %vm695, %v697, %v693
    %v699 = vmul.f32 %v620, %v698
    %v700 = vrcp.pop %v642
    %v701 = vmul.f32 %v642, %v700
    %v702 = vsub.f32 1.0, %v701
    %v703 = vmul.f32 %v700, %v702
    %v704 = vadd.f32 %v700, %v703
    %vm705 = vweird.f32 %v642
    %vm706 = vweird.f32 %v700
    %vm707 = vmor %vm705, %vm706
    %v708 = vsel %vm707, %v700, %v704
    %v709 = vand.u32 2147483647, %v642
    %vm710 = vcmp.eq.f32.partialorder %v709, 8.507059e+37
    %v711 = vand.u32 %v642, 2147483648
    %v712 = vor.u32 1.1754944e-38, %v711
    %v713 = vsel %vm710, %v712, %v708
    %v714 = vmul.f32 %v622, %v713
    %v715 = vrcp.pop %v645
    %v716 = vmul.f32 %v645, %v715
    %v717 = vsub.f32 1.0, %v716
    %v718 = vmul.f32 %v715, %v717
    %v719 = vadd.f32 %v715, %v718
    %vm720 = vweird.f32 %v645
    %vm721 = vweird.f32 %v715
    %vm722 = vmor %vm720, %vm721
    %v723 = vsel %vm722, %v715, %v719
    %v724 = vand.u32 2147483647, %v645
    %vm725 = vcmp.eq.f32.partialorder %v724, 8.507059e+37
    %v726 = vand.u32 %v645, 2147483648
    %v727 = vor.u32 1.1754944e-38, %v726
    %v728 = vsel %vm725, %v727, %v723
    %v729 = vmul.f32 %v624, %v728
    %v730 = vrcp.pop %v648
    %v731 = vmul.f32 %v648, %v730
    %v732 = vsub.f32 1.0, %v731
    %v733 = vmul.f32 %v730, %v732
    %v734 = vadd.f32 %v730, %v733
    %vm735 = vweird.f32 %v648
    %vm736 = vweird.f32 %v730
    %vm737 = vmor %vm735, %vm736
    %v738 = vsel %vm737, %v730, %v734
    %v739 = vand.u32 2147483647, %v648
    %vm740 = vcmp.eq.f32.partialorder %v739, 8.507059e+37
    %v741 = vand.u32 %v648, 2147483648
    %v742 = vor.u32 1.1754944e-38, %v741
    %v743 = vsel %vm740, %v742, %v738
    %v744 = vmul.f32 %v626, %v743
    %v745 = vrcp.pop %v651
    %v746 = vmul.f32 %v651, %v745
    %v747 = vsub.f32 1.0, %v746
    %v748 = vmul.f32 %v745, %v747
    %v749 = vadd.f32 %v745, %v748
    %vm750 = vweird.f32 %v651
    %vm751 = vweird.f32 %v745
    %vm752 = vmor %vm750, %vm751
    %v753 = vsel %vm752, %v745, %v749
    %v754 = vand.u32 2147483647, %v651
    %vm755 = vcmp.eq.f32.partialorder %v754, 8.507059e+37
    %v756 = vand.u32 %v651, 2147483648
    %v757 = vor.u32 1.1754944e-38, %v756
    %v758 = vsel %vm755, %v757, %v753
    %v759 = vmul.f32 %v628, %v758
    %v760 = vrcp.pop %v654
    %v761 = vmul.f32 %v654, %v760
    %v762 = vsub.f32 1.0, %v761
    %v763 = vmul.f32 %v760, %v762
    %v764 = vadd.f32 %v760, %v763
    %vm765 = vweird.f32 %v654
    %vm766 = vweird.f32 %v760
    %vm767 = vmor %vm765, %vm766
    %v768 = vsel %vm767, %v760, %v764
    %v769 = vand.u32 2147483647, %v654
    %vm770 = vcmp.eq.f32.partialorder %v769, 8.507059e+37
    %v771 = vand.u32 %v654, 2147483648
    %v772 = vor.u32 1.1754944e-38, %v771
    %v773 = vsel %vm770, %v772, %v768
    %v774 = vmul.f32 %v630, %v773
    %775 = vrot.lane.b32.xlu0 %v440, 96
    %v776 = vpop.permute.xlu0 %775
    %v779 = vsel %vm582, %v669, 0
    %v782 = vsel %vm582, %v684, 0
    %v785 = vsel %vm582, %v699, 0
    %v788 = vsel %vm582, %v714, 0
    %v791 = vsel %vm582, %v729, 0
    %v794 = vsel %vm582, %v744, 0
    %v797 = vsel %vm582, %v759, 0
    %v800 = vsel %vm582, %v774, 0
    %802 = vmatpush.msra.mxu0 0.0
    %803 = vmatpush.msra.mxu0 0.0
    %804 = vmatpush.msra.mxu0 0.0
    %805 = vmatpush.msra.mxu0 0.0
    %806 = vmatpush.msra.mxu0 0.0
    %807 = vmatpush.msra.mxu0 0.0
    %808 = vmatpush.msra.mxu0 0.0
    %809 = vmatpush.msra.mxu0 0.0
    %810 = vmatpush.msra.mxu0 0.0
    %811 = vmatpush.msra.mxu0 0.0
    %812 = vmatpush.msra.mxu0 0.0
    %813 = vmatpush.msra.mxu0 0.0
    %814 = vmatpush.msra.mxu0 0.0
    %815 = vmatpush.msra.mxu0 0.0
    %816 = vmatpush.msra.mxu0 0.0
    %817 = vmatpush.msra.mxu0 %v776
    %818 = vmatmul.f32.gmra.mxu0 %v779
    %v819 = vpop.f32.mrf.mxu0
    %v820 = vadd.f32 0.0, %v819
    %821 = vmatmul.f32.gmra.mxu0 %v782
    %v822 = vpop.f32.mrf.mxu0
    %v823 = vadd.f32 0.0, %v822
    %824 = vmatmul.f32.gmra.mxu0 %v785
    %v825 = vpop.f32.mrf.mxu0
    %v826 = vadd.f32 0.0, %v825
    %827 = vmatmul.f32.gmra.mxu0 %v788
    %v828 = vpop.f32.mrf.mxu0
    %v829 = vadd.f32 0.0, %v828
    %830 = vmatmul.f32.gmra.mxu0 %v791
    %v831 = vpop.f32.mrf.mxu0
    %v832 = vadd.f32 0.0, %v831
    %833 = vmatmul.f32.gmra.mxu0 %v794
    %v834 = vpop.f32.mrf.mxu0
    %v835 = vadd.f32 0.0, %v834
    %836 = vmatmul.f32.gmra.mxu0 %v797
    %v837 = vpop.f32.mrf.mxu0
    %v838 = vadd.f32 0.0, %v837
    %839 = vmatmul.f32.gmra.mxu0 %v800
    %v840 = vpop.f32.mrf.mxu0
    %v841 = vadd.f32 0.0, %v840
    %842 = vdwg.mxu0
    %v843 = vperm.slane %v442, 0
    %v844 = vmul.f32 %v820, %v843
    %v845 = vmul.f32 %v823, %v843
    %v846 = vadd.f32 %v844, 0.0
    %v847 = vadd.f32 %v845, 0.0
    %v848 = vperm.slane %v444, 0
    %v849 = vmul.f32 %v826, %v848
    %v850 = vmul.f32 %v829, %v848
    %v851 = vadd.f32 %v846, %v849
    %v852 = vadd.f32 %v847, %v850
    %v853 = vperm.slane %v446, 0
    %v854 = vmul.f32 %v832, %v853
    %v855 = vmul.f32 %v835, %v853
    %v856 = vadd.f32 %v851, %v854
    %v857 = vadd.f32 %v852, %v855
    %v858 = vperm.slane %v448, 0
    %v859 = vmul.f32 %v838, %v858
    %v860 = vmul.f32 %v841, %v858
    %v861 = vadd.f32 %v856, %v859
    %v862 = vadd.f32 %v857, %v860
    %v863 = vld [vmem:[#allocation5 + $0x80] sm:$0xff]
    %v864 = vld [vmem:[#allocation5 + $0x88] sm:$0xff]
    %v865 = vld [vmem:[#allocation5 + $0x90] sm:$0xff]
    %v866 = vld [vmem:[#allocation5 + $0x98] sm:$0xff]
    %v867 = vld [vmem:[#allocation5 + $0x224] sm:$0x1]
    %v868 = vperm.slane %v867, 0
    %v870 = vsel %vm52, %v861, 0
    %v873 = vsel %vm52, %v862, 0
    %875 = vmatpush.msra.mxu0 0.0
    %876 = vmatpush.msra.mxu0 0.0
    %877 = vmatpush.msra.mxu0 0.0
    %878 = vmatpush.msra.mxu0 0.0
    %879 = vmatpush.msra.mxu0 0.0
    %880 = vmatpush.msra.mxu0 0.0
    %881 = vmatpush.msra.mxu0 0.0
    %882 = vmatpush.msra.mxu0 0.0
    %883 = vmatpush.msra.mxu0 0.0
    %884 = vmatpush.msra.mxu0 0.0
    %885 = vmatpush.msra.mxu0 0.0
    %886 = vmatpush.msra.mxu0 0.0
    %887 = vmatpush.msra.mxu0 %v866
    %888 = vmatpush.msra.mxu0 %v865
    %889 = vmatpush.msra.mxu0 %v864
    %890 = vmatpush.msra.mxu0 %v863
    %891 = vmatmul.f32.gmra.mxu0 %v870
    %v892 = vpop.f32.mrf.mxu0
    %v893 = vadd.f32 %v868, %v892
    %894 = vmatmul.f32.gmra.mxu0 %v873
    %v895 = vpop.f32.mrf.mxu0
    %v896 = vadd.f32 %v868, %v895
    %897 = vdwg.mxu0
    %v898 = vadd.f32 %v893, %v44
    %v899 = vadd.f32 %v896, %v45
    %v900 = vld [vmem:[#allocation5 + $0x229] sm:$0x1]
    %v901 = vld [vmem:[#allocation5 + $0x22a] sm:$0x1]
    %v902 = vsel %vm52, %v898, 0.0
    %903 = vadd.xlane.f32.xlu0 %v902
    %v904 = vpop.xlane.xlu0 %903
    %v905 = vsel %vm52, %v899, 0.0
    %906 = vadd.xlane.f32.xlu0 %v905
    %v907 = vpop.xlane.xlu0 %906
    %v908 = vmul.f32 %v904, %v389
    %v909 = vmul.f32 %v907, %v389
    %v910 = vsub.f32 %v898, %v908
    %v911 = vsub.f32 %v899, %v909
    %v912 = vmul.f32 %v910, %v910
    %v913 = vmul.f32 %v911, %v911
    %v914 = vsel %vm52, %v912, 0.0
    %915 = vadd.xlane.f32.xlu0 %v914
    %v916 = vpop.xlane.xlu0 %915
    %v917 = vsel %vm52, %v913, 0.0
    %918 = vadd.xlane.f32.xlu0 %v917
    %v919 = vpop.xlane.xlu0 %918
    %v920 = vmul.f32 %v916, %v389
    %v921 = vmul.f32 %v919, %v389
    %v922 = vadd.f32 %v920, 1e-05
    %v923 = vadd.f32 %v921, 1e-05
    %v924 = vrsqrt.pop %v922
    %v925 = vmul.f32 %v924, %v922
    %v926 = vmul.f32 %v925, %v924
    %v927 = vmul.f32 0.5, %v926
    %v928 = vsub.f32 1.5, %v927
    %v929 = vmul.f32 %v924, %v928
    %vm930 = vweird.f32 %v922
    %vm931 = vweird.f32 %v924
    %vm932 = vmor %vm930, %vm931
    %v933 = vsel %vm932, %v924, %v929
    %v934 = vrsqrt.pop %v923
    %v935 = vmul.f32 %v934, %v923
    %v936 = vmul.f32 %v935, %v934
    %v937 = vmul.f32 0.5, %v936
    %v938 = vsub.f32 1.5, %v937
    %v939 = vmul.f32 %v934, %v938
    %vm940 = vweird.f32 %v923
    %vm941 = vweird.f32 %v934
    %vm942 = vmor %vm940, %vm941
    %v943 = vsel %vm942, %v934, %v939
    %v944 = vmul.f32 %v910, %v933
    %v945 = vmul.f32 %v911, %v943
    %v946 = vperm.slane %v900, 0
    %v947 = vmul.f32 %v944, %v946
    %v948 = vmul.f32 %v945, %v946
    %v949 = vperm.slane %v901, 0
    %v950 = vadd.f32 %v947, %v949
    %v951 = vadd.f32 %v948, %v949
    %v952 = vld [vmem:[#allocation5 + $0xa0] sm:$0xff]
    %v953 = vld [vmem:[#allocation5 + $0xa8] sm:$0xff]
    %v954 = vld [vmem:[#allocation5 + $0xb0] sm:$0xff]
    %v955 = vld [vmem:[#allocation5 + $0xb8] sm:$0xff]
    %v956 = vld [vmem:[#allocation5 + $0x225] sm:$0x1]
    %v957 = vperm.slane %v956, 0
    %v959 = vsel %vm52, %v950, 0
    %v962 = vsel %vm52, %v951, 0
    %964 = vmatpush.msra.mxu0 0.0
    %965 = vmatpush.msra.mxu0 0.0
    %966 = vmatpush.msra.mxu0 0.0
    %967 = vmatpush.msra.mxu0 0.0
    %968 = vmatpush.msra.mxu0 0.0
    %969 = vmatpush.msra.mxu0 0.0
    %970 = vmatpush.msra.mxu0 0.0
    %971 = vmatpush.msra.mxu0 0.0
    %972 = vmatpush.msra.mxu0 0.0
    %973 = vmatpush.msra.mxu0 0.0
    %974 = vmatpush.msra.mxu0 0.0
    %975 = vmatpush.msra.mxu0 0.0
    %976 = vmatpush.msra.mxu0 %v955
    %977 = vmatpush.msra.mxu0 %v954
    %978 = vmatpush.msra.mxu0 %v953
    %979 = vmatpush.msra.mxu0 %v952
    %980 = vmatmul.f32.gmra.mxu0 %v959
    %v981 = vpop.f32.mrf.mxu0
    %v982 = vadd.f32 %v957, %v981
    %983 = vmatmul.f32.gmra.mxu0 %v962
    %v984 = vpop.f32.mrf.mxu0
    %v985 = vadd.f32 %v957, %v984
    %986 = vdwg.mxu0
    %v987 = vmul.f32 %v982, 0.5
    %v988 = vmul.f32 %v985, 0.5
    %v989 = vmul.f32 %v982, 0.70710677
    %v990 = vmul.f32 %v985, 0.70710677
    %v991 = vmul.f32 %v989, %v989
    %v992 = vmin.f32 16.0, %v991
    %v993 = vmul.f32 %v992, 2.1237322e-06
    %v994 = vadd.f32 %v993, 0.00028619796
    %v995 = vmul.f32 %v992, %v994
    %v996 = vadd.f32 %v995, 0.0036580483
    %v997 = vmul.f32 %v992, %v996
    %v998 = vadd.f32 %v997, 0.05243302
    %v999 = vmul.f32 %v992, %v998
    %v1000 = vadd.f32 %v999, 0.18741608
    %v1001 = vmul.f32 %v992, %v1000
    %v1002 = vadd.f32 %v1001, 1.1283791
    %v1003 = vmul.f32 %v989, %v1002
    %v1004 = vmul.f32 %v992, 3.8918573e-05
    %v1005 = vadd.f32 %v1004, 0.001143296
    %v1006 = vmul.f32 %v992, %v1005
    %v1007 = vadd.f32 %v1006, 0.014752088
    %v1008 = vmul.f32 %v992, %v1007
    %v1009 = vadd.f32 %v1008, 0.112945676
    %v1010 = vmul.f32 %v992, %v1009
    %v1011 = vadd.f32 %v1010, 0.4994258
    %v1012 = vmul.f32 %v992, %v1011
    %v1013 = vadd.f32 %v1012, 1.0
    %v1014 = vrcp.pop %v1013
    %v1015 = vmul.f32 %v1013, %v1014
    %v1016 = vsub.f32 1.0, %v1015
    %v1017 = vmul.f32 %v1014, %v1016
    %v1018 = vadd.f32 %v1014, %v1017
    %vm1019 = vweird.f32 %v1013
    %vm1020 = vweird.f32 %v1014
    %vm1021 = vmor %vm1019, %vm1020
    %v1022 = vsel %vm1021, %v1014, %v1018
    %v1023 = vand.u32 2147483647, %v1013
    %vm1024 = vcmp.eq.f32.partialorder %v1023, 8.507059e+37
    %v1025 = vand.u32 %v1013, 2147483648
    %v1026 = vor.u32 1.1754944e-38, %v1025
    %v1027 = vsel %vm1024, %v1026, %v1022
    %v1028 = vmul.f32 %v1003, %v1027
    %v1029 = vmin.f32 %v1028, 1.0
    %v1030 = vmax.f32 %v1029, -1.0
    %v1031 = vmul.f32 %v990, %v990
    %v1032 = vmin.f32 16.0, %v1031
    %v1033 = vmul.f32 %v1032, 2.1237322e-06
    %v1034 = vadd.f32 %v1033, 0.00028619796
    %v1035 = vmul.f32 %v1032, %v1034
    %v1036 = vadd.f32 %v1035, 0.0036580483
    %v1037 = vmul.f32 %v1032, %v1036
    %v1038 = vadd.f32 %v1037, 0.05243302
    %v1039 = vmul.f32 %v1032, %v1038
    %v1040 = vadd.f32 %v1039, 0.18741608
    %v1041 = vmul.f32 %v1032, %v1040
    %v1042 = vadd.f32 %v1041, 1.1283791
    %v1043 = vmul.f32 %v990, %v1042
    %v1044 = vmul.f32 %v1032, 3.8918573e-05
    %v1045 = vadd.f32 %v1044, 0.001143296
    %v1046 = vmul.f32 %v1032, %v1045
    %v1047 = vadd.f32 %v1046, 0.014752088
    %v1048 = vmul.f32 %v1032, %v1047
    %v1049 = vadd.f32 %v1048, 0.112945676
    %v1050 = vmul.f32 %v1032, %v1049
    %v1051 = vadd.f32 %v1050, 0.4994258
    %v1052 = vmul.f32 %v1032, %v1051
    %v1053 = vadd.f32 %v1052, 1.0
    %v1054 = vrcp.pop %v1053
    %v1055 = vmul.f32 %v1053, %v1054
    %v1056 = vsub.f32 1.0, %v1055
    %v1057 = vmul.f32 %v1054, %v1056
    %v1058 = vadd.f32 %v1054, %v1057
    %vm1059 = vweird.f32 %v1053
    %vm1060 = vweird.f32 %v1054
    %vm1061 = vmor %vm1059, %vm1060
    %v1062 = vsel %vm1061, %v1054, %v1058
    %v1063 = vand.u32 2147483647, %v1053
    %vm1064 = vcmp.eq.f32.partialorder %v1063, 8.507059e+37
    %v1065 = vand.u32 %v1053, 2147483648
    %v1066 = vor.u32 1.1754944e-38, %v1065
    %v1067 = vsel %vm1064, %v1066, %v1062
    %v1068 = vmul.f32 %v1043, %v1067
    %v1069 = vmin.f32 %v1068, 1.0
    %v1070 = vmax.f32 %v1069, -1.0
    %v1071 = vadd.f32 %v1030, 1.0
    %v1072 = vadd.f32 %v1070, 1.0
    %v1073 = vmul.f32 %v987, %v1071
    %v1074 = vmul.f32 %v988, %v1072
    %v1075 = vld [vmem:[#allocation5 + $0xc0] sm:$0xff]
    %v1076 = vld [vmem:[#allocation5 + $0xc8] sm:$0xff]
    %v1077 = vld [vmem:[#allocation5 + $0xd0] sm:$0xff]
    %v1078 = vld [vmem:[#allocation5 + $0xd8] sm:$0xff]
    %v1079 = vld [vmem:[#allocation5 + $0xe0] sm:$0xff]
    %v1080 = vld [vmem:[#allocation5 + $0xe8] sm:$0xff]
    %v1081 = vld [vmem:[#allocation5 + $0xf0] sm:$0xff]
    %v1082 = vld [vmem:[#allocation5 + $0xf8] sm:$0xff]
    %v1083 = vld [vmem:[#allocation5 + $0x100] sm:$0xff]
    %v1084 = vld [vmem:[#allocation5 + $0x108] sm:$0xff]
    %v1085 = vld [vmem:[#allocation5 + $0x110] sm:$0xff]
    %v1086 = vld [vmem:[#allocation5 + $0x118] sm:$0xff]
    %v1087 = vld [vmem:[#allocation5 + $0x120] sm:$0xff]
    %v1088 = vld [vmem:[#allocation5 + $0x128] sm:$0xff]
    %v1089 = vld [vmem:[#allocation5 + $0x130] sm:$0xff]
    %v1090 = vld [vmem:[#allocation5 + $0x138] sm:$0xff]
    %v1091 = vld [vmem:[#allocation5 + $0x226] sm:$0x1]
    %v1092 = vperm.slane %v1091, 0
    %1093 = vmatpush.msra.mxu0 %v1090
    %1094 = vmatpush.msra.mxu0 %v1089
    %1095 = vmatpush.msra.mxu0 %v1088
    %1096 = vmatpush.msra.mxu0 %v1087
    %1097 = vmatpush.msra.mxu0 %v1086
    %1098 = vmatpush.msra.mxu0 %v1085
    %1099 = vmatpush.msra.mxu0 %v1084
    %1100 = vmatpush.msra.mxu0 %v1083
    %1101 = vmatpush.msra.mxu0 %v1082
    %1102 = vmatpush.msra.mxu0 %v1081
    %1103 = vmatpush.msra.mxu0 %v1080
    %1104 = vmatpush.msra.mxu0 %v1079
    %1105 = vmatpush.msra.mxu0 %v1078
    %1106 = vmatpush.msra.mxu0 %v1077
    %1107 = vmatpush.msra.mxu0 %v1076
    %1108 = vmatpush.msra.mxu0 %v1075
    %1109 = vmatmul.f32.gmra.mxu0 %v1073
    %v1110 = vpop.f32.mrf.mxu0
    %v1111 = vadd.f32 %v1092, %v1110
    %1112 = vmatmul.f32.gmra.mxu0 %v1074
    %v1113 = vpop.f32.mrf.mxu0
    %v1114 = vadd.f32 %v1092, %v1113
    %1115 = vdwg.mxu0
    %v1116 = vadd.f32 %v950, %v1111
    %v1117 = vadd.f32 %v951, %v1114
    %v1118 = vld [vmem:[#allocation5 + $0x22b] sm:$0x1]
    %v1119 = vld [vmem:[#allocation5 + $0x22c] sm:$0x1]
    %v1120 = vsel %vm52, %v1116, 0.0
    %1121 = vadd.xlane.f32.xlu0 %v1120
    %v1122 = vpop.xlane.xlu0 %1121
    %v1123 = vsel %vm52, %v1117, 0.0
    %1124 = vadd.xlane.f32.xlu0 %v1123
    %v1125 = vpop.xlane.xlu0 %1124
    %v1126 = vmul.f32 %v1122, %v389
    %v1127 = vmul.f32 %v1125, %v389
    %v1128 = vsub.f32 %v1116, %v1126
    %v1129 = vsub.f32 %v1117, %v1127
    %v1130 = vmul.f32 %v1128, %v1128
    %v1131 = vmul.f32 %v1129, %v1129
    %v1132 = vsel %vm52, %v1130, 0.0
    %1133 = vadd.xlane.f32.xlu0 %v1132
    %v1134 = vpop.xlane.xlu0 %1133
    %v1135 = vsel %vm52, %v1131, 0.0
    %1136 = vadd.xlane.f32.xlu0 %v1135
    %v1137 = vpop.xlane.xlu0 %1136
    %v1138 = vmul.f32 %v1134, %v389
    %v1139 = vmul.f32 %v1137, %v389
    %v1140 = vadd.f32 %v1138, 1e-05
    %v1141 = vadd.f32 %v1139, 1e-05
    %v1142 = vrsqrt.pop %v1140
    %v1143 = vmul.f32 %v1142, %v1140
    %v1144 = vmul.f32 %v1143, %v1142
    %v1145 = vmul.f32 0.5, %v1144
    %v1146 = vsub.f32 1.5, %v1145
    %v1147 = vmul.f32 %v1142, %v1146
    %vm1148 = vweird.f32 %v1140
    %vm1149 = vweird.f32 %v1142
    %vm1150 = vmor %vm1148, %vm1149
    %v1151 = vsel %vm1150, %v1142, %v1147
    %v1152 = vrsqrt.pop %v1141
    %v1153 = vmul.f32 %v1152, %v1141
    %v1154 = vmul.f32 %v1153, %v1152
    %v1155 = vmul.f32 0.5, %v1154
    %v1156 = vsub.f32 1.5, %v1155
    %v1157 = vmul.f32 %v1152, %v1156
    %vm1158 = vweird.f32 %v1141
    %vm1159 = vweird.f32 %v1152
    %vm1160 = vmor %vm1158, %vm1159
    %v1161 = vsel %vm1160, %v1152, %v1157
    %v1162 = vmul.f32 %v1128, %v1151
    %v1163 = vmul.f32 %v1129, %v1161
    %v1164 = vperm.slane %v1118, 0
    %v1165 = vmul.f32 %v1162, %v1164
    %v1166 = vmul.f32 %v1163, %v1164
    %v1167 = vperm.slane %v1119, 0
    %v1168 = vadd.f32 %v1165, %v1167
    %v1169 = vadd.f32 %v1166, %v1167
    %1170 = vst.msk [vmem:[#allocation7] sm:$0xff] %vm52, %v1168
    %1171 = vst.msk [vmem:[#allocation7 + $0x8] sm:$0xff] %vm52, %v1169
    // Predicated region
    $region18: #{tpu_custom_call.1} parent=1 // pred_check
      _
    $region19: #{tpu_custom_call.1} parent=1 // pred_check_branch
      %1173 = sbr.rel (0) target = $region21
    $region20: #{tpu_custom_call.1} parent=1 // pred_region
      %1175 = vsyncadd [#allocation4], 0
      %s1176 = sshll.u32 [#allocation7], 4
      %s1177 = int_to_ptr.vmem [resolvable:$true] %s1176
      %s1178 = sshll.u32 %s2, 4
      %s1179 = int_to_ptr.hbm [resolvable:$true] %s1178
      %1184 = dma.vmem_to_hbm [thread:$0]  %s1177, 256, %s1179, [#allocation4], 128, 128, 8
    $region21: #{tpu_custom_call.1} parent=1 // pred_fallthru
      _
    // Predicated region
    $region22: #{tpu_custom_call.1} parent=1 // pred_check
      _
    $region23: #{tpu_custom_call.1} parent=1 // pred_check_branch
      %1186 = sbr.rel (0) target = $region25
    $region24: #{tpu_custom_call.1} parent=1 // pred_region
      %1188 = dma.done [#allocation4], 256
    $region25: #{tpu_custom_call.1} parent=1 // pred_fallthru
      _
    %1189 = vsyncpa [#allocation3], 1
    %1190 = vsyncpa [#allocation6], 1
    %1191 = vsyncpa [#allocation4], 1

</llo_original>
